<compile_context>
chip_gen: v7x
topology: tpu7x:2x2x1
jax: 0.10.0
libtpu: 0.0.40
codegen_flags: <defaults>
</compile_context>

<pallas_src>
import jax
import jax.numpy as jnp
from jax import lax
from jax.experimental import pallas as pl
from jax.experimental.pallas import tpu as pltpu

SCORE_SCALE = 0.001              # SiamFC output scaling applied in the head
TM = 256                         # lane-axis (M) tile width for the conv matmul
LANE = 128
VMEM_LIMIT = 32 * 1024 * 1024    # explicit scoped-VMEM budget (safe on v5e/v6e/v7x)


def _round_up(x, m):
    return ((x + m - 1) // m) * m


# ---------------------------------------------------------------------------
# Pallas kernels
# ---------------------------------------------------------------------------
def _conv_mm_kernel(w_ref, b_ref, p_ref, o_ref):
    # w: (Cout, Kp) bf16 (VMEM-resident), b: (Cout, 1) f32 (resident),
    # p: (Kp, TM) bf16 (streamed)  ->  o: (Cout, TM) = relu(w @ p + b)
    acc = jnp.dot(w_ref[...], p_ref[...], preferred_element_type=jnp.float32)
    acc = acc + b_ref[...]
    o_ref[...] = jnp.maximum(acc, 0.0).astype(o_ref.dtype)


def conv_mm_bias_relu(wmat, bias, patches):
    """Transposed conv-as-matmul: out (Cout, M) = relu(wmat @ patches + bias)."""
    Cout, Kp = wmat.shape
    Kp2, M = patches.shape
    assert Kp == Kp2 and M % TM == 0
    n_tiles = M // TM
    flops = 2 * Cout * Kp * M
    bytes_accessed = int(wmat.size * wmat.dtype.itemsize
                         + bias.size * bias.dtype.itemsize
                         + patches.size * patches.dtype.itemsize
                         + Cout * M * 2)
    return pl.pallas_call(
        _conv_mm_kernel,
        out_shape=jax.ShapeDtypeStruct((Cout, M), jnp.bfloat16),
        grid=(n_tiles,),
        in_specs=[
            pl.BlockSpec((Cout, Kp), lambda i: (0, 0)),   # weights stay resident
            pl.BlockSpec((Cout, 1), lambda i: (0, 0)),    # bias stays resident
            pl.BlockSpec((Kp, TM), lambda i: (0, i)),     # activation tiles stream
        ],
        out_specs=pl.BlockSpec((Cout, TM), lambda i: (0, i)),
        compiler_params=pltpu.CompilerParams(
            dimension_semantics=("parallel",),
            vmem_limit_bytes=VMEM_LIMIT),
        cost_estimate=pl.CostEstimate(flops=flops, transcendentals=0,
                                      bytes_accessed=bytes_accessed),
    )(wmat, bias, patches)


def _xcorr_kernel(z_ref, p_ref, o_ref):
    # z: (1, 1, Kd) exemplar features, p: (1, Kd, L) search patches (L lane-padded)
    # TODO(synk): per-sample (1, Kd) LHS only uses one MXU row, and patch
    # extraction is still host-side im2col; an in-kernel strided patch gather
    # plus a multi-row reformulation is the remaining head improvement.
    z = z_ref[0]                                                   # (1, Kd)
    p = p_ref[0]                                                   # (Kd, L)
    acc = jnp.dot(z, p, preferred_element_type=jnp.float32)        # (1, L)
    o_ref[0] = (SCORE_SCALE * acc).astype(o_ref.dtype)


# ---------------------------------------------------------------------------
# Plain-JAX glue (patch extraction in channel-major layout, layer plumbing)
# ---------------------------------------------------------------------------
def im2col_cbhw(f, kh, kw):
    """f: (C, B, H, W) -> (C*kh*kw, B*Ho*Wo); feature index = c*kh*kw + i*kw + j."""
    C, B, H, W = f.shape
    Ho, Wo = H - kh + 1, W - kw + 1
    cols = [f[:, :, i:i + Ho, j:j + Wo] for i in range(kh) for j in range(kw)]
    p = jnp.stack(cols, axis=1)                 # (C, kh*kw, B, Ho, Wo)
    return p.reshape(C * kh * kw, B * Ho * Wo), (Ho, Wo)


def head_patches_cbhw(xf, hz, wz):
    """xf: (C, B, Hx, Wx) -> (B, C*hz*wz, Ho*Wo); k = c*hz*wz + i*wz + j."""
    C, B, Hx, Wx = xf.shape
    Ho, Wo = Hx - hz + 1, Wx - wz + 1
    cols = [xf[:, :, i:i + Ho, j:j + Wo] for i in range(hz) for j in range(wz)]
    p = jnp.stack(cols, axis=1)                 # (C, hz*wz, B, Ho, Wo)
    p = jnp.transpose(p, (2, 0, 1, 3, 4))       # (B, C, hz*wz, Ho, Wo)
    return p.reshape(B, C * hz * wz, Ho * Wo), (Ho, Wo)


def fused_features(zc, xc, params):
    """Shared-weight backbone applied to both branches with one matmul per layer.

    zc, xc: channel-major activations (C, B, H, W)."""
    B = zc.shape[1]
    for w, b in params:
        Cout, Cin, K, _ = w.shape
        Kdim = Cin * K * K
        Kp = _round_up(Kdim, 128)               # pad contraction dim

        pz, (Hoz, Woz) = im2col_cbhw(zc, K, K)  # (Kdim, Mz)
        px, (Hox, Wox) = im2col_cbhw(xc, K, K)  # (Kdim, Mx)
        Mz, Mx = pz.shape[1], px.shape[1]
        Mp = _round_up(Mz + Mx, TM)

        patches = jnp.concatenate([pz, px], axis=1).astype(jnp.bfloat16)
        patches = jnp.pad(patches, ((0, Kp - Kdim), (0, Mp - (Mz + Mx))))
        wmat = jnp.pad(w.reshape(Cout, Kdim).astype(jnp.bfloat16),
                       ((0, 0), (0, Kp - Kdim)))
        bias = b.reshape(Cout, 1).astype(jnp.float32)

        out = conv_mm_bias_relu(wmat, bias, patches)          # (Cout, Mp) bf16
        zc = out[:, :Mz].reshape(Cout, B, Hoz, Woz)
        xc = out[:, Mz:Mz + Mx].reshape(Cout, B, Hox, Wox)
    return zc, xc


def xcorr_head(zf, xf):
    """SiamFC head: per-sample cross-correlation of exemplar over search features."""
    C, B, Hz, Wz = zf.shape
    Kd = C * Hz * Wz
    patches, (Ho, Wo) = head_patches_cbhw(xf, Hz, Wz)         # (B, Kd, Ho*Wo)
    L = _round_up(Ho * Wo, LANE)                              # lane-dense output
    patches = jnp.pad(patches.astype(jnp.bfloat16),
                      ((0, 0), (0, 0), (0, L - Ho * Wo)))
    zvec = jnp.transpose(zf, (1, 0, 2, 3)).reshape(B, 1, Kd).astype(jnp.bfloat16)

    flops = 2 * B * Kd * L
    bytes_accessed = int(zvec.size * 2 + patches.size * 2 + B * L * 4)
    out = pl.pallas_call(
        _xcorr_kernel,
        out_shape=jax.ShapeDtypeStruct((B, 1, L), jnp.float32),
        grid=(B,),
        in_specs=[
            pl.BlockSpec((1, 1, Kd), lambda b: (b, 0, 0)),
            pl.BlockSpec((1, Kd, L), lambda b: (b, 0, 0)),
        ],
        out_specs=pl.BlockSpec((1, 1, L), lambda b: (b, 0, 0)),
        compiler_params=pltpu.CompilerParams(
            dimension_semantics=("parallel",),
            vmem_limit_bytes=VMEM_LIMIT),
        cost_estimate=pl.CostEstimate(flops=flops, transcendentals=0,
                                      bytes_accessed=bytes_accessed),
    )(zvec, patches)
    return out[:, :, :Ho * Wo].reshape(B, 1, Ho, Wo)


@jax.jit
def siamese_forward(z, x, params):
    """SiameseNet.forward(z, x): features(z), features(x), head(z, x)."""
    zc = jnp.transpose(z, (1, 0, 2, 3))   # NCHW -> channel-major (C, B, H, W)
    xc = jnp.transpose(x, (1, 0, 2, 3))
    zf, xf = fused_features(zc, xc, params)
    return xcorr_head(zf, xf)


# ---------------------------------------------------------------------------
# Deterministic parameter init (synthetic; shapes mimic a small SiamFC backbone)
# ---------------------------------------------------------------------------
def init_params(key):
    specs = [(8, 3, 3), (16, 8, 3)]             # (Cout, Cin, K)
    params = []
    for cout, cin, k in specs:
        key, kw, kb = jax.random.split(key, 3)
        fan_in = cin * k * k
        w = jax.random.normal(kw, (cout, cin, k, k), jnp.float32) / jnp.sqrt(fan_in)
        b = jax.random.normal(kb, (cout,), jnp.float32) * 0.01
        params.append((w, b))
    return params


# ---------------------------------------------------------------------------
# Pure-JAX f32 reference for correctness check
# ---------------------------------------------------------------------------
def ref_forward(z, x, params):
    def conv(inp, w, b):
        out = lax.conv_general_dilated(
            inp, w, (1, 1), "VALID",
            dimension_numbers=("NCHW", "OIHW", "NCHW"))
        return jnp.maximum(out + b[None, :, None, None], 0.0)

    zf, xf = z, x
    for w, b in params:
        zf = conv(zf, w, b)
        xf = conv(xf, w, b)

    def per_sample(xb, zb):
        return lax.conv_general_dilated(
            xb[None], zb[None], (1, 1), "VALID",
            dimension_numbers=("NCHW", "OIHW", "NCHW"))[0]

    out = jax.vmap(per_sample)(xf, zf)          # (B, 1, Ho, Wo)
    return SCORE_SCALE * out


if __name__ == "__main__":
    key = jax.random.PRNGKey(0)
    kz, kx = jax.random.split(key)
    # z = exemplar crop, x = search crop (NCHW)
    z = jax.random.normal(kz, (2, 3, 16, 16), jnp.float32)
    x = jax.random.normal(kx, (2, 3, 24, 24), jnp.float32)
    params = init_params(jax.random.PRNGKey(42))

    out = siamese_forward(z, x, params)
    out = jax.block_until_ready(out)

    ref = ref_forward(z, x, params)
    assert out.shape == ref.shape == (2, 1, 9, 9), out.shape
    # bf16 MXU inputs with f32 accumulation: allow a few-percent deviation.
    err = float(jnp.max(jnp.abs(out.astype(jnp.float32) - ref)))
    scale = float(jnp.max(jnp.abs(ref))) + 1e-6
    assert err <= 0.05 * scale + 1e-4, f"mismatch vs reference: {err} (scale {scale})"

    print("KERNEL_OK")
</pallas_src>

<mosaic_0001>
module attributes {stable_mosaic.version = 11 : i64} {
  func.func @_conv_mm_kernel(%arg0: i32, %arg1: memref<8x128xbf16, #tpu.memory_space<vmem>>, %arg2: memref<8x1xf32, #tpu.memory_space<vmem>>, %arg3: memref<128x256xbf16, #tpu.memory_space<vmem>>, %arg4: memref<8x256xbf16, #tpu.memory_space<vmem>>) attributes {dimension_semantics = [#tpu.dimension_semantics<parallel>], iteration_bounds = array<i64: 6>, scalar_prefetch = 0 : i64, scratch_operands = 0 : i64, tpu.core_type = #tpu.core_type<tc>, window_params = [{pipeline_mode = #tpu.pipeline_mode<synchronous>, transform_indices = @transform_0, window_bounds = array<i64: 8, 128>}, {pipeline_mode = #tpu.pipeline_mode<synchronous>, transform_indices = @transform_1, window_bounds = array<i64: 8, 1>}, {transform_indices = @transform_2, window_bounds = array<i64: 128, 256>}, {transform_indices = @transform_3, window_bounds = array<i64: 8, 256>}]} {
    %c0 = arith.constant 0 : index
    %c0_0 = arith.constant 0 : index
    %0 = vector.load %arg1[%c0, %c0_0] : memref<8x128xbf16, #tpu.memory_space<vmem>>, vector<8x128xbf16>
    %c0_1 = arith.constant 0 : index
    %c0_2 = arith.constant 0 : index
    %1 = vector.load %arg3[%c0_1, %c0_2] : memref<128x256xbf16, #tpu.memory_space<vmem>>, vector<128x256xbf16>
    %cst = arith.constant dense<0.000000e+00> : vector<8x256xf32>
    %2 = tpu.matmul %0, %1, %cst {dimension_numbers = #tpu.dot_dimension_numbers<[1], [0], [0], [1], [0, 0, 1, 1], [], []>} : vector<8x128xbf16>, vector<128x256xbf16>, vector<8x256xf32> -> vector<8x256xf32>
    %c0_3 = arith.constant 0 : index
    %c0_4 = arith.constant 0 : index
    %3 = vector.load %arg2[%c0_3, %c0_4] : memref<8x1xf32, #tpu.memory_space<vmem>>, vector<8x1xf32>
    %4 = vector.broadcast %3 : vector<8x1xf32> to vector<8x256xf32>
    %5 = arith.addf %2, %4 : vector<8x256xf32>
    %cst_5 = arith.constant 0.000000e+00 : f32
    %6 = vector.broadcast %cst_5 : f32 to vector<8x256xf32>
    %7 = arith.maximumf %5, %6 : vector<8x256xf32>
    %8 = arith.truncf %7 : vector<8x256xf32> to vector<8x256xbf16>
    %c0_6 = arith.constant 0 : index
    %c0_7 = arith.constant 0 : index
    %9 = vector.load %arg4[%c0_6, %c0_7] : memref<8x256xbf16, #tpu.memory_space<vmem>>, vector<8x256xbf16>
    tpu.vector_store %arg4[%c0_6, %c0_7], %8 {strides = array<i32>} : memref<8x256xbf16, #tpu.memory_space<vmem>>, vector<8x256xbf16>,
    return
  }
  func.func @transform_0(%arg0: i32) -> (i32, i32) {
    %c0_i32 = arith.constant 0 : i32
    %c0_i32_0 = arith.constant 0 : i32
    %c0_i32_1 = arith.constant 0 : i32
    return %c0_i32, %c0_i32_0 : i32, i32
  }
  func.func @transform_1(%arg0: i32) -> (i32, i32) {
    %c0_i32 = arith.constant 0 : i32
    %c0_i32_0 = arith.constant 0 : i32
    %c0_i32_1 = arith.constant 0 : i32
    return %c0_i32, %c0_i32_0 : i32, i32
  }
  func.func @transform_2(%arg0: i32) -> (i32, i32) {
    %c0_i32 = arith.constant 0 : i32
    %c0_i32_0 = arith.constant 0 : i32
    return %c0_i32, %arg0 : i32, i32
  }
  func.func @transform_3(%arg0: i32) -> (i32, i32) {
    %c0_i32 = arith.constant 0 : i32
    %c0_i32_0 = arith.constant 0 : i32
    return %c0_i32, %arg0 : i32, i32
  }
}

module attributes {stable_mosaic.version = 11 : i64} {
  func.func @_conv_mm_kernel(%arg0: i32, %arg1: memref<16x128xbf16, #tpu.memory_space<vmem>>, %arg2: memref<16x1xf32, #tpu.memory_space<vmem>>, %arg3: memref<128x256xbf16, #tpu.memory_space<vmem>>, %arg4: memref<16x256xbf16, #tpu.memory_space<vmem>>) attributes {dimension_semantics = [#tpu.dimension_semantics<parallel>], iteration_bounds = array<i64: 5>, scalar_prefetch = 0 : i64, scratch_operands = 0 : i64, tpu.core_type = #tpu.core_type<tc>, window_params = [{pipeline_mode = #tpu.pipeline_mode<synchronous>, transform_indices = @transform_0, window_bounds = array<i64: 16, 128>}, {pipeline_mode = #tpu.pipeline_mode<synchronous>, transform_indices = @transform_1, window_bounds = array<i64: 16, 1>}, {transform_indices = @transform_2, window_bounds = array<i64: 128, 256>}, {transform_indices = @transform_3, window_bounds = array<i64: 16, 256>}]} {
    %c0 = arith.constant 0 : index
    %c0_0 = arith.constant 0 : index
    %0 = vector.load %arg1[%c0, %c0_0] : memref<16x128xbf16, #tpu.memory_space<vmem>>, vector<16x128xbf16>
    %c0_1 = arith.constant 0 : index
    %c0_2 = arith.constant 0 : index
    %1 = vector.load %arg3[%c0_1, %c0_2] : memref<128x256xbf16, #tpu.memory_space<vmem>>, vector<128x256xbf16>
    %cst = arith.constant dense<0.000000e+00> : vector<16x256xf32>
    %2 = tpu.matmul %0, %1, %cst {dimension_numbers = #tpu.dot_dimension_numbers<[1], [0], [0], [1], [0, 0, 1, 1], [], []>} : vector<16x128xbf16>, vector<128x256xbf16>, vector<16x256xf32> -> vector<16x256xf32>
    %c0_3 = arith.constant 0 : index
    %c0_4 = arith.constant 0 : index
    %3 = vector.load %arg2[%c0_3, %c0_4] : memref<16x1xf32, #tpu.memory_space<vmem>>, vector<16x1xf32>
    %4 = vector.broadcast %3 : vector<16x1xf32> to vector<16x256xf32>
    %5 = arith.addf %2, %4 : vector<16x256xf32>
    %cst_5 = arith.constant 0.000000e+00 : f32
    %6 = vector.broadcast %cst_5 : f32 to vector<16x256xf32>
    %7 = arith.maximumf %5, %6 : vector<16x256xf32>
    %8 = arith.truncf %7 : vector<16x256xf32> to vector<16x256xbf16>
    %c0_6 = arith.constant 0 : index
    %c0_7 = arith.constant 0 : index
    %9 = vector.load %arg4[%c0_6, %c0_7] : memref<16x256xbf16, #tpu.memory_space<vmem>>, vector<16x256xbf16>
    tpu.vector_store %arg4[%c0_6, %c0_7], %8 {strides = array<i32>} : memref<16x256xbf16, #tpu.memory_space<vmem>>, vector<16x256xbf16>,
    return
  }
  func.func @transform_0(%arg0: i32) -> (i32, i32) {
    %c0_i32 = arith.constant 0 : i32
    %c0_i32_0 = arith.constant 0 : i32
    %c0_i32_1 = arith.constant 0 : i32
    return %c0_i32, %c0_i32_0 : i32, i32
  }
  func.func @transform_1(%arg0: i32) -> (i32, i32) {
    %c0_i32 = arith.constant 0 : i32
    %c0_i32_0 = arith.constant 0 : i32
    %c0_i32_1 = arith.constant 0 : i32
    return %c0_i32, %c0_i32_0 : i32, i32
  }
  func.func @transform_2(%arg0: i32) -> (i32, i32) {
    %c0_i32 = arith.constant 0 : i32
    %c0_i32_0 = arith.constant 0 : i32
    return %c0_i32, %arg0 : i32, i32
  }
  func.func @transform_3(%arg0: i32) -> (i32, i32) {
    %c0_i32 = arith.constant 0 : i32
    %c0_i32_0 = arith.constant 0 : i32
    return %c0_i32, %arg0 : i32, i32
  }
}

module attributes {stable_mosaic.version = 11 : i64} {
  func.func @_xcorr_kernel(%arg0: i32, %arg1: memref<1x1x2304xbf16, #tpu.memory_space<vmem>>, %arg2: memref<1x2304x128xbf16, #tpu.memory_space<vmem>>, %arg3: memref<1x1x128xf32, #tpu.memory_space<vmem>>) attributes {dimension_semantics = [#tpu.dimension_semantics<parallel>], iteration_bounds = array<i64: 2>, scalar_prefetch = 0 : i64, scratch_operands = 0 : i64, tpu.core_type = #tpu.core_type<tc>, window_params = [{transform_indices = @transform_0, window_bounds = array<i64: 1, 1, 2304>}, {transform_indices = @transform_1, window_bounds = array<i64: 1, 2304, 128>}, {transform_indices = @transform_2, window_bounds = array<i64: 1, 1, 128>}]} {
    %c0 = arith.constant 0 : index
    %c0_0 = arith.constant 0 : index
    %c0_1 = arith.constant 0 : index
    %0 = vector.load %arg1[%c0, %c0_0, %c0_1] : memref<1x1x2304xbf16, #tpu.memory_space<vmem>>, vector<1x1x2304xbf16>
    %1 = vector.shape_cast %0 : vector<1x1x2304xbf16> to vector<1x2304xbf16>
    %c0_2 = arith.constant 0 : index
    %c0_3 = arith.constant 0 : index
    %c0_4 = arith.constant 0 : index
    %2 = vector.load %arg2[%c0_2, %c0_3, %c0_4] : memref<1x2304x128xbf16, #tpu.memory_space<vmem>>, vector<1x2304x128xbf16>
    %3 = vector.shape_cast %2 : vector<1x2304x128xbf16> to vector<2304x128xbf16>
    %cst = arith.constant dense<0.000000e+00> : vector<1x128xf32>
    %4 = tpu.matmul %1, %3, %cst {dimension_numbers = #tpu.dot_dimension_numbers<[1], [0], [0], [1], [0, 0, 1, 1], [], []>} : vector<1x2304xbf16>, vector<2304x128xbf16>, vector<1x128xf32> -> vector<1x128xf32>
    %cst_5 = arith.constant 1.000000e-03 : f32
    %5 = vector.broadcast %cst_5 : f32 to vector<1x128xf32>
    %6 = arith.mulf %5, %4 : vector<1x128xf32>
    %c0_6 = arith.constant 0 : index
    %c0_7 = arith.constant 0 : index
    %c0_8 = arith.constant 0 : index
    %7 = vector.load %arg3[%c0_6, %c0_7, %c0_8] : memref<1x1x128xf32, #tpu.memory_space<vmem>>, vector<1x1x128xf32>
    %8 = vector.shape_cast %7 : vector<1x1x128xf32> to vector<1x128xf32>
    %9 = vector.shape_cast %6 : vector<1x128xf32> to vector<1x1x128xf32>
    tpu.vector_store %arg3[%c0_6, %c0_7, %c0_8], %9 {strides = array<i32>} : memref<1x1x128xf32, #tpu.memory_space<vmem>>, vector<1x1x128xf32>,
    return
  }
  func.func @transform_0(%arg0: i32) -> (i32, i32, i32) {
    %c0_i32 = arith.constant 0 : i32
    %c0_i32_0 = arith.constant 0 : i32
    %c0_i32_1 = arith.constant 0 : i32
    return %arg0, %c0_i32, %c0_i32_0 : i32, i32, i32
  }
  func.func @transform_1(%arg0: i32) -> (i32, i32, i32) {
    %c0_i32 = arith.constant 0 : i32
    %c0_i32_0 = arith.constant 0 : i32
    %c0_i32_1 = arith.constant 0 : i32
    return %arg0, %c0_i32, %c0_i32_0 : i32, i32, i32
  }
  func.func @transform_2(%arg0: i32) -> (i32, i32, i32) {
    %c0_i32 = arith.constant 0 : i32
    %c0_i32_0 = arith.constant 0 : i32
    %c0_i32_1 = arith.constant 0 : i32
    return %arg0, %c0_i32, %c0_i32_0 : i32, i32, i32
  }
}

</mosaic_0001>

<llo_original>
// kernel: siamese_forward.3
$region0: #{siamese_forward.3}
  #allocation0 [shape = 'u32[]', space=smem, size = 0x4, offset = 0x4, fixed_abs, tag = 'smem constant byte address 0x4 - core index']
  #allocation1 [shape = 'u32[144,128]{1,0:T(1,128)}', space=vmem, size = 0x12000, scoped, tag = 'internal scratch']
  %s0 = inlined_call_operand.vmem [shape: bf16[8,128], index: 0, kind: input, shape index: {}]
  %s1 = inlined_call_operand.vmem [shape: f32[8,1], index: 1, kind: input, shape index: {}]
  %s2 = inlined_call_operand.vmem [shape: bf16[128,1536], index: 2, kind: input, shape index: {}]
  %s3 = inlined_call_operand.vmem [shape: bf16[8,1536], index: 3, kind: output, shape index: {}]
  %s4 = sld [smem:[#allocation0]]
  $region83: #{siamese_forward.3} parent=0
    _
  %s6 = ssub.s32 1, %s4
  %s7 = scalar_select 0, %s6, %s4
  $region1: #{siamese_forward.3} parent=0
    #allocation2 [shape = 'u8[131072]{0}', space=vmem, size = 0x20000, scoped, tag = 'input window, operand 2']
    loop: start=0, step=1, limit=8
    $region2: #{siamese_forward.3} parent=1 // loop_pre_header
      _
    $region3: #{siamese_forward.3} parent=1 // loop_header
      %s9 = sphi 0, %s13
      %p10 = scmp.ge.s32.totalorder %s9, 8
      %s17 = sphi 0, %s17
      %s19 = sphi 0, %s17
      %s20 = sphi 0, %s19
      %s34 = sphi 0, %s20
      %s38 = sphi 0, %s38
      %s40 = sphi 0, %s38
      %s41 = sphi 0, %s40
      %s55 = sphi 0, %s41
      %s61 = sphi 0, %s63
      %s64 = sphi 0, %s61
      %s65 = sphi 0, %s64
      %s81 = sphi 0, %s65
      %s87 = sphi 0, %s89
      %s90 = sphi 0, %s87
      %s91 = sphi 0, %s90
      %s107 = sphi 0, %s91
    $region4: #{siamese_forward.3} parent=1 // loop_header_branch
      %12 = sbr.rel (%p10) target = $region8
    $region5: #{siamese_forward.3} parent=1 // loop_body
      %s14 = ssub.s32 %s9, 1
      %s15 = ssub.s32 %s9, 2
      %s16 = sadd.s32 %s9, 1
      %s18 = sadd.s32 %s17, 1
      %p21 = scmp.eq.s32.totalorder %s9, 5
      %p22 = scmp.ne.s32.totalorder %s17, %s19
      %p23 = scmp.eq.s32.totalorder %s9, 0
      %p24 = por %p22, %p23
      %p25 = scmp.ne.s32.totalorder %s17, %s19
      %p26 = scmp.eq.s32.totalorder %s14, 5
      %p27 = por %p25, %p26
      %p28 = scmp.ne.s32.totalorder %s19, %s20
      %p29 = scmp.eq.s32.totalorder %s14, 0
      %p30 = por %p28, %p29
      %p31 = scmp.ne.s32.totalorder %s19, %s20
      %p32 = scmp.eq.s32.totalorder %s15, 5
      %p33 = por %p31, %p32
      %p35 = scmp.ne.s32.totalorder %s20, %s34
      %p36 = scmp.eq.s32.totalorder %s15, 0
      %p37 = por %p35, %p36
      %s39 = sadd.s32 %s38, 1
      %p42 = scmp.eq.s32.totalorder %s9, 5
      %p43 = scmp.ne.s32.totalorder %s38, %s40
      %p44 = scmp.eq.s32.totalorder %s9, 0
      %p45 = por %p43, %p44
      %p46 = scmp.ne.s32.totalorder %s38, %s40
      %p47 = scmp.eq.s32.totalorder %s14, 5
      %p48 = por %p46, %p47
      %p49 = scmp.ne.s32.totalorder %s40, %s41
      %p50 = scmp.eq.s32.totalorder %s14, 0
      %p51 = por %p49, %p50
      %p52 = scmp.ne.s32.totalorder %s40, %s41
      %p53 = scmp.eq.s32.totalorder %s15, 5
      %p54 = por %p52, %p53
      %p56 = scmp.ne.s32.totalorder %s41, %s55
      %p57 = scmp.eq.s32.totalorder %s15, 0
      %p58 = por %p56, %p57
      %s59 = ssub.s32 %s9, %s16
      %p60 = scmp.eq.s32.totalorder %s59, 0
      %s62 = sadd.s32 %s61, 1
      %s63 = scalar_select %p60, %s61, %s62
      %p66 = pneg %p60
      %p67 = scmp.eq.s32.totalorder %s9, 5
      %p68 = por %p66, %p67
      %p69 = scmp.ne.s32.totalorder %s61, %s64
      %p70 = scmp.eq.s32.totalorder %s9, 0
      %p71 = por %p69, %p70
      %p72 = scmp.ne.s32.totalorder %s61, %s64
      %p73 = scmp.eq.s32.totalorder %s14, 5
      %p74 = por %p72, %p73
      %p75 = scmp.ne.s32.totalorder %s64, %s65
      %p76 = scmp.eq.s32.totalorder %s14, 0
      %p77 = por %p75, %p76
      %p78 = scmp.ne.s32.totalorder %s64, %s65
      %p79 = scmp.eq.s32.totalorder %s15, 5
      %p80 = por %p78, %p79
      %p82 = scmp.ne.s32.totalorder %s65, %s81
      %p83 = scmp.eq.s32.totalorder %s15, 0
      %p84 = por %p82, %p83
      %s85 = ssub.s32 %s9, %s16
      %p86 = scmp.eq.s32.totalorder %s85, 0
      %s88 = sadd.s32 %s87, 1
      %s89 = scalar_select %p86, %s87, %s88
      %p92 = pneg %p86
      %p93 = scmp.eq.s32.totalorder %s9, 5
      %p94 = por %p92, %p93
      %p95 = scmp.ne.s32.totalorder %s87, %s90
      %p96 = scmp.eq.s32.totalorder %s9, 0
      %p97 = por %p95, %p96
      %p98 = scmp.ne.s32.totalorder %s87, %s90
      %p99 = scmp.eq.s32.totalorder %s14, 5
      %p100 = por %p98, %p99
      %p101 = scmp.ne.s32.totalorder %s90, %s91
      %p102 = scmp.eq.s32.totalorder %s14, 0
      %p103 = por %p101, %p102
      %p104 = scmp.ne.s32.totalorder %s90, %s91
      %p105 = scmp.eq.s32.totalorder %s15, 5
      %p106 = por %p104, %p105
      %p108 = scmp.ne.s32.totalorder %s91, %s107
      %p109 = scmp.eq.s32.totalorder %s15, 0
      %p110 = por %p108, %p109
      %p111 = scmp.le.s32.totalorder 1, %s9
      %p112 = scmp.lt.s32.totalorder %s9, 7
      %p113 = pnand %p111, %p112
      %p114 = pneg %p113
      // Predicated region
      $region9: #{siamese_forward.3} parent=5 // pred_check
        _
      $region10: #{siamese_forward.3} parent=5 // pred_check_branch
        %116 = sbr.rel (%p113) target = $region12
      $region11: #{siamese_forward.3} parent=5 // pred_region
        %s117 = ssub.s32 %s9, 1
        // Predicated region
        $region13: #{siamese_forward.3} parent=11 // pred_check
          %p118 = pneg %p30
        $region14: #{siamese_forward.3} parent=11 // pred_check_branch
          %120 = sbr.rel (%p118) target = $region16
        $region15: #{siamese_forward.3} parent=11 // pred_region
          _
        $region16: #{siamese_forward.3} parent=11 // pred_fallthru
          _
        // Predicated region
        $region17: #{siamese_forward.3} parent=11 // pred_check
          %p121 = pneg %p51
        $region18: #{siamese_forward.3} parent=11 // pred_check_branch
          %123 = sbr.rel (%p121) target = $region20
        $region19: #{siamese_forward.3} parent=11 // pred_region
          _
        $region20: #{siamese_forward.3} parent=11 // pred_fallthru
          _
      $region12: #{siamese_forward.3} parent=5 // pred_fallthru
        _
      %p124 = scmp.lt.s32.totalorder %s9, 6
      // Predicated region
      $region21: #{siamese_forward.3} parent=5 // pred_check
        %p125 = pneg %p124
      $region22: #{siamese_forward.3} parent=5 // pred_check_branch
        %127 = sbr.rel (%p125) target = $region24
      $region23: #{siamese_forward.3} parent=5 // pred_region
        // Predicated region
        $region25: #{siamese_forward.3} parent=23 // pred_check
          %p128 = pneg %p71
        $region26: #{siamese_forward.3} parent=23 // pred_check_branch
          %130 = sbr.rel (%p128) target = $region28
        $region27: #{siamese_forward.3} parent=23 // pred_region
          %s131 = sand.u32 %s61, 1
          %s132 = sand.u32 %s61, 1
          %s133 = smul.addr %s132, 128
          %s134 = scalar_lea.vmem [#allocation2], %s133
          %s135 = smul.u32 2, %s9
          %s136 = smul.addr %s135, 4
          %s137 = scalar_lea.vmem %s2, %s136
          // Predicated region
          $region29: #{siamese_forward.3} parent=27 // pred_check
            _
          $region30: #{siamese_forward.3} parent=27 // pred_check_branch
            %139 = sbr.rel (0) target = $region32
          $region31: #{siamese_forward.3} parent=27 // pred_region
            // Predicated region
            $region33: #{siamese_forward.3} parent=31 // pred_check
              _
            $region34: #{siamese_forward.3} parent=31 // pred_check_branch
              %141 = sbr.rel (0) target = $region36
            $region35: #{siamese_forward.3} parent=31 // pred_region
              // Predicated region
              $region48: #{siamese_forward.3} parent=35 // pred_check
                _
              $region49: #{siamese_forward.3} parent=35 // pred_check_branch
                %186 = sbr.rel (0) target = $region51
              $region50: #{siamese_forward.3} parent=35 // pred_region
                loop: start=0, step=1, limit=1
                $region52: #{siamese_forward.3} parent=50 // loop_pre_header
                  _
                $region53: #{siamese_forward.3} parent=50 // loop_header
                  %s188 = sphi 0, %s192
                  %p189 = scmp.ge.s32.totalorder %s188, 1
                  %s193 = sphi %s137, %s137
                  %s194 = sphi %s134, %s134
                $region54: #{siamese_forward.3} parent=50 // loop_header_branch
                  %191 = sbr.rel (%p189) target = $region58
                $region55: #{siamese_forward.3} parent=50 // loop_body
                  %v195 = vld [vmem:[%s193] sm:$0xff]
                  %196 = vst [vmem:[%s194] sm:$0xff] %v195
                  %v197 = vld [vmem:[%s193 + $0x30] sm:$0xff]
                  %198 = vst [vmem:[%s194 + $0x8] sm:$0xff] %v197
                  %v199 = vld [vmem:[%s193 + $0x60] sm:$0xff]
                  %200 = vst [vmem:[%s194 + $0x10] sm:$0xff] %v199
                  %v201 = vld [vmem:[%s193 + $0x90] sm:$0xff]
                  %202 = vst [vmem:[%s194 + $0x18] sm:$0xff] %v201
                  %v203 = vld [vmem:[%s193 + $0xc0] sm:$0xff]
                  %204 = vst [vmem:[%s194 + $0x20] sm:$0xff] %v203
                  %v205 = vld [vmem:[%s193 + $0xf0] sm:$0xff]
                  %206 = vst [vmem:[%s194 + $0x28] sm:$0xff] %v205
                  %v207 = vld [vmem:[%s193 + $0x120] sm:$0xff]
                  %208 = vst [vmem:[%s194 + $0x30] sm:$0xff] %v207
                  %v209 = vld [vmem:[%s193 + $0x150] sm:$0xff]
                  %210 = vst [vmem:[%s194 + $0x38] sm:$0xff] %v209
                  %v211 = vld [vmem:[%s193 + $0x180] sm:$0xff]
                  %212 = vst [vmem:[%s194 + $0x40] sm:$0xff] %v211
                  %v213 = vld [vmem:[%s193 + $0x1b0] sm:$0xff]
                  %214 = vst [vmem:[%s194 + $0x48] sm:$0xff] %v213
                  %v215 = vld [vmem:[%s193 + $0x1e0] sm:$0xff]
                  %216 = vst [vmem:[%s194 + $0x50] sm:$0xff] %v215
                  %v217 = vld [vmem:[%s193 + $0x210] sm:$0xff]
                  %218 = vst [vmem:[%s194 + $0x58] sm:$0xff] %v217
                  %v219 = vld [vmem:[%s193 + $0x240] sm:$0xff]
                  %220 = vst [vmem:[%s194 + $0x60] sm:$0xff] %v219
                  %v221 = vld [vmem:[%s193 + $0x270] sm:$0xff]
                  %222 = vst [vmem:[%s194 + $0x68] sm:$0xff] %v221
                  %v223 = vld [vmem:[%s193 + $0x2a0] sm:$0xff]
                  %224 = vst [vmem:[%s194 + $0x70] sm:$0xff] %v223
                  %v225 = vld [vmem:[%s193 + $0x2d0] sm:$0xff]
                  %226 = vst [vmem:[%s194 + $0x78] sm:$0xff] %v225
                $region56: #{siamese_forward.3} parent=50 // loop_footer
                  %s192 = sadd.s32 1, %s188
                $region57: #{siamese_forward.3} parent=50 // loop_footer_branch
                  %187 = sbr.rel target = $region53
                $region58: #{siamese_forward.3} parent=50 // loop_exit
                  _
              $region51: #{siamese_forward.3} parent=35 // pred_fallthru
                _
              // Predicated region
              $region59: #{siamese_forward.3} parent=35 // pred_check
                _
              $region60: #{siamese_forward.3} parent=35 // pred_check_branch
                %228 = sbr.rel target = $region62
              $region61: #{siamese_forward.3} parent=35 // pred_region
                _
              $region62: #{siamese_forward.3} parent=35 // pred_fallthru
                _
            $region36: #{siamese_forward.3} parent=31 // pred_fallthru
              _
            // Predicated region
            $region37: #{siamese_forward.3} parent=31 // pred_check
              _
            $region38: #{siamese_forward.3} parent=31 // pred_check_branch
              %143 = sbr.rel target = $region40
            $region39: #{siamese_forward.3} parent=31 // pred_region
              loop: start=0, step=1, limit=1
              $region41: #{siamese_forward.3} parent=39 // loop_pre_header
                _
              $region42: #{siamese_forward.3} parent=39 // loop_header
                %s146 = sphi 0, %s150
                %p147 = scmp.ge.s32.totalorder %s146, 1
                %s151 = sphi %s137, %s137
                %s152 = sphi %s134, %s134
              $region43: #{siamese_forward.3} parent=39 // loop_header_branch
                %149 = sbr.rel (%p147) target = $region47
              $region44: #{siamese_forward.3} parent=39 // loop_body
                %v153 = vld [vmem:[%s151] sm:$0xff]
                %154 = vst [vmem:[%s152] sm:$0xff] %v153
                %v155 = vld [vmem:[%s151 + $0x30] sm:$0xff]
                %156 = vst [vmem:[%s152 + $0x8] sm:$0xff] %v155
                %v157 = vld [vmem:[%s151 + $0x60] sm:$0xff]
                %158 = vst [vmem:[%s152 + $0x10] sm:$0xff] %v157
                %v159 = vld [vmem:[%s151 + $0x90] sm:$0xff]
                %160 = vst [vmem:[%s152 + $0x18] sm:$0xff] %v159
                %v161 = vld [vmem:[%s151 + $0xc0] sm:$0xff]
                %162 = vst [vmem:[%s152 + $0x20] sm:$0xff] %v161
                %v163 = vld [vmem:[%s151 + $0xf0] sm:$0xff]
                %164 = vst [vmem:[%s152 + $0x28] sm:$0xff] %v163
                %v165 = vld [vmem:[%s151 + $0x120] sm:$0xff]
                %166 = vst [vmem:[%s152 + $0x30] sm:$0xff] %v165
                %v167 = vld [vmem:[%s151 + $0x150] sm:$0xff]
                %168 = vst [vmem:[%s152 + $0x38] sm:$0xff] %v167
                %v169 = vld [vmem:[%s151 + $0x180] sm:$0xff]
                %170 = vst [vmem:[%s152 + $0x40] sm:$0xff] %v169
                %v171 = vld [vmem:[%s151 + $0x1b0] sm:$0xff]
                %172 = vst [vmem:[%s152 + $0x48] sm:$0xff] %v171
                %v173 = vld [vmem:[%s151 + $0x1e0] sm:$0xff]
                %174 = vst [vmem:[%s152 + $0x50] sm:$0xff] %v173
                %v175 = vld [vmem:[%s151 + $0x210] sm:$0xff]
                %176 = vst [vmem:[%s152 + $0x58] sm:$0xff] %v175
                %v177 = vld [vmem:[%s151 + $0x240] sm:$0xff]
                %178 = vst [vmem:[%s152 + $0x60] sm:$0xff] %v177
                %v179 = vld [vmem:[%s151 + $0x270] sm:$0xff]
                %180 = vst [vmem:[%s152 + $0x68] sm:$0xff] %v179
                %v181 = vld [vmem:[%s151 + $0x2a0] sm:$0xff]
                %182 = vst [vmem:[%s152 + $0x70] sm:$0xff] %v181
                %v183 = vld [vmem:[%s151 + $0x2d0] sm:$0xff]
                %184 = vst [vmem:[%s152 + $0x78] sm:$0xff] %v183
              $region45: #{siamese_forward.3} parent=39 // loop_footer
                %s150 = sadd.s32 1, %s146
              $region46: #{siamese_forward.3} parent=39 // loop_footer_branch
                %145 = sbr.rel target = $region42
              $region47: #{siamese_forward.3} parent=39 // loop_exit
                _
            $region40: #{siamese_forward.3} parent=31 // pred_fallthru
              _
          $region32: #{siamese_forward.3} parent=27 // pred_fallthru
            _
          %229 = vnop
        $region28: #{siamese_forward.3} parent=23 // pred_fallthru
          _
      $region24: #{siamese_forward.3} parent=5 // pred_fallthru
        _
      %p230 = scmp.le.s32.totalorder 1, %s9
      %p231 = scmp.lt.s32.totalorder %s9, 7
      %p232 = pnand %p230, %p231
      %p233 = pneg %p232
      // Predicated region
      $region63: #{siamese_forward.3} parent=5 // pred_check
        _
      $region64: #{siamese_forward.3} parent=5 // pred_check_branch
        %235 = sbr.rel (%p232) target = $region66
      $region65: #{siamese_forward.3} parent=5 // pred_region
        %s236 = ssub.s32 %s9, 1
        %s237 = sand.u32 %s64, 1
        %s238 = sand.u32 %s64, 1
        %s239 = smul.addr %s238, 128
        %s240 = scalar_lea.vmem [#allocation2], %s239
        // Predicated region
        $region67: #{siamese_forward.3} parent=65 // pred_check
          %p241 = pneg %p77
        $region68: #{siamese_forward.3} parent=65 // pred_check_branch
          %243 = sbr.rel (%p241) target = $region70
        $region69: #{siamese_forward.3} parent=65 // pred_region
          _
        $region70: #{siamese_forward.3} parent=65 // pred_fallthru
          _
        %p244 = pneg %p30
        %p245 = pneg %p27
        %p246 = pneg %p51
        %p247 = pneg %p48
        %s248 = sand.u32 %s64, 1
        %s249 = sand.u32 %s64, 1
        %s250 = smul.addr %s249, 128
        %s251 = scalar_lea.vmem [#allocation2], %s250
        %p252 = pneg %p77
        %p253 = pneg %p74
        %p254 = pneg %p103
        %p255 = pneg %p100
        %s256 = smul.u32 2, %s14
        %p257 = scmp.lt.s32.totalorder %s256, 11
        %s258 = scalar_select %p257, %s256, 11
        %s259 = smul.addr %s258, 4
        %s260 = scalar_lea.vmem %s3, %s259
        %s261 = smul.u32 2, %s14
        %s262 = smul.u32 2, %s14
        %p263 = scmp.lt.s32.totalorder %s262, 11
        %s264 = scalar_select %p263, %s262, 11
        %s265 = smul.addr %s264, 4
        %s266 = scalar_lea.vmem %s3, %s265
        %s267 = smul.u32 2, %s14
        %v269 = vld [vmem:[%s0] sm:$0xf]
        %v270 = vld [vmem:[%s240] sm:$0xff]
        %v271 = vld [vmem:[%s240 + $0x8] sm:$0xff]
        %v272 = vld [vmem:[%s240 + $0x10] sm:$0xff]
        %v273 = vld [vmem:[%s240 + $0x18] sm:$0xff]
        %v274 = vld [vmem:[%s240 + $0x20] sm:$0xff]
        %v275 = vld [vmem:[%s240 + $0x28] sm:$0xff]
        %v276 = vld [vmem:[%s240 + $0x30] sm:$0xff]
        %v277 = vld [vmem:[%s240 + $0x38] sm:$0xff]
        %v278 = vld [vmem:[%s240 + $0x40] sm:$0xff]
        %v279 = vld [vmem:[%s240 + $0x48] sm:$0xff]
        %v280 = vld [vmem:[%s240 + $0x50] sm:$0xff]
        %v281 = vld [vmem:[%s240 + $0x58] sm:$0xff]
        %v282 = vld [vmem:[%s240 + $0x60] sm:$0xff]
        %v283 = vld [vmem:[%s240 + $0x68] sm:$0xff]
        %v284 = vld [vmem:[%s240 + $0x70] sm:$0xff]
        %v285 = vld [vmem:[%s240 + $0x78] sm:$0xff]
        %v286 = vld [vmem:[%s1] sm:$0xff]
        %288 = vset.pattern.permute.xlu0 0
        %289 = vperm.xlu0 %288, %v286
        %v290 = vpop.permute.xlu0 %289
        %v308 = vunpack.c.l.b16 %v270
        %v309 = vunpack.c.h.b16 %v270
        %v310 = vunpack.c.l.b16 %v271
        %v311 = vunpack.c.h.b16 %v271
        %v312 = vunpack.c.l.b16 %v272
        %v313 = vunpack.c.h.b16 %v272
        %v314 = vunpack.c.l.b16 %v273
        %v315 = vunpack.c.h.b16 %v273
        %v316 = vunpack.c.l.b16 %v274
        %v317 = vunpack.c.h.b16 %v274
        %v318 = vunpack.c.l.b16 %v275
        %v319 = vunpack.c.h.b16 %v275
        %v320 = vunpack.c.l.b16 %v276
        %v321 = vunpack.c.h.b16 %v276
        %v322 = vunpack.c.l.b16 %v277
        %v323 = vunpack.c.h.b16 %v277
        %v324 = vunpack.c.l.b16 %v278
        %v325 = vunpack.c.h.b16 %v278
        %v326 = vunpack.c.l.b16 %v279
        %v327 = vunpack.c.h.b16 %v279
        %v328 = vunpack.c.l.b16 %v280
        %v329 = vunpack.c.h.b16 %v280
        %v330 = vunpack.c.l.b16 %v281
        %v331 = vunpack.c.h.b16 %v281
        %v332 = vunpack.c.l.b16 %v282
        %v333 = vunpack.c.h.b16 %v282
        %v334 = vunpack.c.l.b16 %v283
        %v335 = vunpack.c.h.b16 %v283
        %v336 = vunpack.c.l.b16 %v284
        %v337 = vunpack.c.h.b16 %v284
        %v338 = vunpack.c.l.b16 %v285
        %v339 = vunpack.c.h.b16 %v285
        %v340 = vpack.c.b16 %v310, %v308
        %v341 = vpack.c.b16 %v311, %v309
        %v342 = vpack.c.b16 %v314, %v312
        %v343 = vpack.c.b16 %v315, %v313
        %v344 = vpack.c.b16 %v318, %v316
        %v345 = vpack.c.b16 %v319, %v317
        %v346 = vpack.c.b16 %v322, %v320
        %v347 = vpack.c.b16 %v323, %v321
        %v348 = vpack.c.b16 %v326, %v324
        %v349 = vpack.c.b16 %v327, %v325
        %v350 = vpack.c.b16 %v330, %v328
        %v351 = vpack.c.b16 %v331, %v329
        %v352 = vpack.c.b16 %v334, %v332
        %v353 = vpack.c.b16 %v335, %v333
        %v354 = vpack.c.b16 %v338, %v336
        %v355 = vpack.c.b16 %v339, %v337
        %372 = vmatprep.subr.bf16.mxu0 %v341
        %373 = vmatpush1.bf16.msra.mxu0 %v340
        %374 = vmatprep.subr.bf16.mxu0 %v343
        %375 = vmatpush1.bf16.msra.mxu0 %v342
        %376 = vmatprep.subr.bf16.mxu0 %v345
        %377 = vmatpush1.bf16.msra.mxu0 %v344
        %378 = vmatprep.subr.bf16.mxu0 %v347
        %379 = vmatpush1.bf16.msra.mxu0 %v346
        %380 = vmatprep.subr.bf16.mxu0 %v349
        %381 = vmatpush1.bf16.msra.mxu0 %v348
        %382 = vmatprep.subr.bf16.mxu0 %v351
        %383 = vmatpush1.bf16.msra.mxu0 %v350
        %384 = vmatprep.subr.bf16.mxu0 %v353
        %385 = vmatpush1.bf16.msra.mxu0 %v352
        %386 = vmatprep.subr.bf16.mxu0 %v355
        %387 = vmatpush1.bf16.msra.mxu0 %v354
        %388 = vmatprep.subr.bf16.mxu0 0
        %389 = vmatpush1.bf16.msra.mxu0 0
        %390 = vmatprep.subr.bf16.mxu0 0
        %391 = vmatpush1.bf16.msra.mxu0 0
        %392 = vmatprep.subr.bf16.mxu0 0
        %393 = vmatpush1.bf16.msra.mxu0 0
        %394 = vmatprep.subr.bf16.mxu0 0
        %395 = vmatpush1.bf16.msra.mxu0 0
        %396 = vmatprep.subr.bf16.mxu0 0
        %397 = vmatpush1.bf16.msra.mxu0 0
        %398 = vmatprep.subr.bf16.mxu0 0
        %399 = vmatpush1.bf16.msra.mxu0 0
        %400 = vmatprep.subr.bf16.mxu0 0
        %401 = vmatpush1.bf16.msra.mxu0 0
        %402 = vmatprep.subr.bf16.mxu0 0
        %403 = vmatpush1.bf16.msra.mxu0 0
        %404 = vmatprep.mubr.bf16.mxu0 0
        %405 = vmatmul.mubr.bf16.gmra.mrb[0].mxu0 %v269
        %v406 = vpop.f32.mrb[0].mxu0
        %v407 = vadd.f32 %v290, %v406
        %v408 = vpop.f32.mrb[0].mxu0
        %v409 = vadd.f32 %v290, %v408
        %v410 = vpop.f32.mrb[0].mxu0
        %v411 = vpop.f32.mrb[0].mxu0
        %412 = vdwg.mxu0
        %v413 = vmax.f32 %v407, 0.0
        %v414 = vmax.f32 %v409, 0.0
        %v415 = vpack.c.bf16 %v413, %v413
        %v416 = vpack.c.bf16 %v414, %v414
        %v419 = vunpack.c.l.b16 %v415
        %v420 = vunpack.c.l.b16 %v416
        %v421 = vpack.c.b16 %v420, %v419
        %423 = vst [vmem:[%s266] sm:$0xff] %v421
        %s424 = smul.u32 2, %s14
        %p425 = scmp.lt.s32.totalorder %s424, 11
        %s426 = scalar_select %p425, %s424, 11
        %s427 = smul.addr %s426, 4
        %s428 = scalar_lea.vmem %s3, %s427
        // Predicated region
        $region71: #{siamese_forward.3} parent=65 // pred_check
          %p429 = pneg %p100
        $region72: #{siamese_forward.3} parent=65 // pred_check_branch
          %431 = sbr.rel (%p429) target = $region74
        $region73: #{siamese_forward.3} parent=65 // pred_region
          %s432 = smul.u32 2, %s14
        $region74: #{siamese_forward.3} parent=65 // pred_fallthru
          _
      $region66: #{siamese_forward.3} parent=5 // pred_fallthru
        _
      %p433 = scmp.le.s32.totalorder 2, %s9
      // Predicated region
      $region75: #{siamese_forward.3} parent=5 // pred_check
        %p434 = pneg %p433
      $region76: #{siamese_forward.3} parent=5 // pred_check_branch
        %436 = sbr.rel (%p434) target = $region78
      $region77: #{siamese_forward.3} parent=5 // pred_region
        %s437 = ssub.s32 %s9, 2
        // Predicated region
        $region79: #{siamese_forward.3} parent=77 // pred_check
          %p438 = pneg %p106
        $region80: #{siamese_forward.3} parent=77 // pred_check_branch
          %440 = sbr.rel (%p438) target = $region82
        $region81: #{siamese_forward.3} parent=77 // pred_region
          %s441 = smul.u32 2, %s15
          %p442 = scmp.lt.s32.totalorder %s441, 11
          %s443 = scalar_select %p442, %s441, 11
          %s444 = smul.addr %s443, 4
          %s445 = scalar_lea.vmem %s3, %s444
        $region82: #{siamese_forward.3} parent=77 // pred_fallthru
          _
      $region78: #{siamese_forward.3} parent=5 // pred_fallthru
        _
    $region6: #{siamese_forward.3} parent=1 // loop_footer
      %s13 = sadd.s32 1, %s9
    $region7: #{siamese_forward.3} parent=1 // loop_footer_branch
      %8 = sbr.rel target = $region3
    $region8: #{siamese_forward.3} parent=1 // loop_exit
      _

// kernel: siamese_forward.4
$region0: #{siamese_forward.4}
  #allocation0 [shape = 'u32[]', space=smem, size = 0x4, offset = 0x4, fixed_abs, tag = 'smem constant byte address 0x4 - core index']
  #allocation1 [shape = 'u32[144,128]{1,0:T(1,128)}', space=vmem, size = 0x12000, scoped, tag = 'internal scratch']
  %s0 = inlined_call_operand.vmem [shape: bf16[16,128], index: 0, kind: input, shape index: {}]
  %s1 = inlined_call_operand.vmem [shape: f32[16,1], index: 1, kind: input, shape index: {}]
  %s2 = inlined_call_operand.vmem [shape: bf16[128,1280], index: 2, kind: input, shape index: {}]
  %s3 = inlined_call_operand.vmem [shape: bf16[16,1280], index: 3, kind: output, shape index: {}]
  %s4 = sld [smem:[#allocation0]]
  $region117: #{siamese_forward.4} parent=0
    _
  %s6 = ssub.s32 1, %s4
  %s7 = scalar_select 0, %s6, %s4
  $region1: #{siamese_forward.4} parent=0
    #allocation2 [shape = 'u8[131072]{0}', space=vmem, size = 0x20000, scoped, tag = 'input window, operand 2']
    #allocation3 [shape = 'u8[16384]{0}', space=vmem, size = 0x4000, scoped, tag = 'output window, operand 0']
    loop: start=0, step=1, limit=7
    $region2: #{siamese_forward.4} parent=1 // loop_pre_header
      _
    $region3: #{siamese_forward.4} parent=1 // loop_header
      %s9 = sphi 0, %s13
      %p10 = scmp.ge.s32.totalorder %s9, 7
      %s17 = sphi 0, %s17
      %s19 = sphi 0, %s17
      %s20 = sphi 0, %s19
      %s34 = sphi 0, %s20
      %s38 = sphi 0, %s38
      %s40 = sphi 0, %s38
      %s41 = sphi 0, %s40
      %s55 = sphi 0, %s41
      %s61 = sphi 0, %s63
      %s64 = sphi 0, %s61
      %s65 = sphi 0, %s64
      %s81 = sphi 0, %s65
      %s87 = sphi 0, %s89
      %s90 = sphi 0, %s87
      %s91 = sphi 0, %s90
      %s107 = sphi 0, %s91
    $region4: #{siamese_forward.4} parent=1 // loop_header_branch
      %12 = sbr.rel (%p10) target = $region8
    $region5: #{siamese_forward.4} parent=1 // loop_body
      %s14 = ssub.s32 %s9, 1
      %s15 = ssub.s32 %s9, 2
      %s16 = sadd.s32 %s9, 1
      %s18 = sadd.s32 %s17, 1
      %p21 = scmp.eq.s32.totalorder %s9, 4
      %p22 = scmp.ne.s32.totalorder %s17, %s19
      %p23 = scmp.eq.s32.totalorder %s9, 0
      %p24 = por %p22, %p23
      %p25 = scmp.ne.s32.totalorder %s17, %s19
      %p26 = scmp.eq.s32.totalorder %s14, 4
      %p27 = por %p25, %p26
      %p28 = scmp.ne.s32.totalorder %s19, %s20
      %p29 = scmp.eq.s32.totalorder %s14, 0
      %p30 = por %p28, %p29
      %p31 = scmp.ne.s32.totalorder %s19, %s20
      %p32 = scmp.eq.s32.totalorder %s15, 4
      %p33 = por %p31, %p32
      %p35 = scmp.ne.s32.totalorder %s20, %s34
      %p36 = scmp.eq.s32.totalorder %s15, 0
      %p37 = por %p35, %p36
      %s39 = sadd.s32 %s38, 1
      %p42 = scmp.eq.s32.totalorder %s9, 4
      %p43 = scmp.ne.s32.totalorder %s38, %s40
      %p44 = scmp.eq.s32.totalorder %s9, 0
      %p45 = por %p43, %p44
      %p46 = scmp.ne.s32.totalorder %s38, %s40
      %p47 = scmp.eq.s32.totalorder %s14, 4
      %p48 = por %p46, %p47
      %p49 = scmp.ne.s32.totalorder %s40, %s41
      %p50 = scmp.eq.s32.totalorder %s14, 0
      %p51 = por %p49, %p50
      %p52 = scmp.ne.s32.totalorder %s40, %s41
      %p53 = scmp.eq.s32.totalorder %s15, 4
      %p54 = por %p52, %p53
      %p56 = scmp.ne.s32.totalorder %s41, %s55
      %p57 = scmp.eq.s32.totalorder %s15, 0
      %p58 = por %p56, %p57
      %s59 = ssub.s32 %s9, %s16
      %p60 = scmp.eq.s32.totalorder %s59, 0
      %s62 = sadd.s32 %s61, 1
      %s63 = scalar_select %p60, %s61, %s62
      %p66 = pneg %p60
      %p67 = scmp.eq.s32.totalorder %s9, 4
      %p68 = por %p66, %p67
      %p69 = scmp.ne.s32.totalorder %s61, %s64
      %p70 = scmp.eq.s32.totalorder %s9, 0
      %p71 = por %p69, %p70
      %p72 = scmp.ne.s32.totalorder %s61, %s64
      %p73 = scmp.eq.s32.totalorder %s14, 4
      %p74 = por %p72, %p73
      %p75 = scmp.ne.s32.totalorder %s64, %s65
      %p76 = scmp.eq.s32.totalorder %s14, 0
      %p77 = por %p75, %p76
      %p78 = scmp.ne.s32.totalorder %s64, %s65
      %p79 = scmp.eq.s32.totalorder %s15, 4
      %p80 = por %p78, %p79
      %p82 = scmp.ne.s32.totalorder %s65, %s81
      %p83 = scmp.eq.s32.totalorder %s15, 0
      %p84 = por %p82, %p83
      %s85 = ssub.s32 %s9, %s16
      %p86 = scmp.eq.s32.totalorder %s85, 0
      %s88 = sadd.s32 %s87, 1
      %s89 = scalar_select %p86, %s87, %s88
      %p92 = pneg %p86
      %p93 = scmp.eq.s32.totalorder %s9, 4
      %p94 = por %p92, %p93
      %p95 = scmp.ne.s32.totalorder %s87, %s90
      %p96 = scmp.eq.s32.totalorder %s9, 0
      %p97 = por %p95, %p96
      %p98 = scmp.ne.s32.totalorder %s87, %s90
      %p99 = scmp.eq.s32.totalorder %s14, 4
      %p100 = por %p98, %p99
      %p101 = scmp.ne.s32.totalorder %s90, %s91
      %p102 = scmp.eq.s32.totalorder %s14, 0
      %p103 = por %p101, %p102
      %p104 = scmp.ne.s32.totalorder %s90, %s91
      %p105 = scmp.eq.s32.totalorder %s15, 4
      %p106 = por %p104, %p105
      %p108 = scmp.ne.s32.totalorder %s91, %s107
      %p109 = scmp.eq.s32.totalorder %s15, 0
      %p110 = por %p108, %p109
      %p111 = scmp.le.s32.totalorder 1, %s9
      %p112 = scmp.lt.s32.totalorder %s9, 6
      %p113 = pnand %p111, %p112
      %p114 = pneg %p113
      // Predicated region
      $region9: #{siamese_forward.4} parent=5 // pred_check
        _
      $region10: #{siamese_forward.4} parent=5 // pred_check_branch
        %116 = sbr.rel (%p113) target = $region12
      $region11: #{siamese_forward.4} parent=5 // pred_region
        %s117 = ssub.s32 %s9, 1
        // Predicated region
        $region13: #{siamese_forward.4} parent=11 // pred_check
          %p118 = pneg %p30
        $region14: #{siamese_forward.4} parent=11 // pred_check_branch
          %120 = sbr.rel (%p118) target = $region16
        $region15: #{siamese_forward.4} parent=11 // pred_region
          _
        $region16: #{siamese_forward.4} parent=11 // pred_fallthru
          _
        // Predicated region
        $region17: #{siamese_forward.4} parent=11 // pred_check
          %p121 = pneg %p51
        $region18: #{siamese_forward.4} parent=11 // pred_check_branch
          %123 = sbr.rel (%p121) target = $region20
        $region19: #{siamese_forward.4} parent=11 // pred_region
          _
        $region20: #{siamese_forward.4} parent=11 // pred_fallthru
          _
      $region12: #{siamese_forward.4} parent=5 // pred_fallthru
        _
      %p124 = scmp.lt.s32.totalorder %s9, 5
      // Predicated region
      $region21: #{siamese_forward.4} parent=5 // pred_check
        %p125 = pneg %p124
      $region22: #{siamese_forward.4} parent=5 // pred_check_branch
        %127 = sbr.rel (%p125) target = $region24
      $region23: #{siamese_forward.4} parent=5 // pred_region
        // Predicated region
        $region25: #{siamese_forward.4} parent=23 // pred_check
          %p128 = pneg %p71
        $region26: #{siamese_forward.4} parent=23 // pred_check_branch
          %130 = sbr.rel (%p128) target = $region28
        $region27: #{siamese_forward.4} parent=23 // pred_region
          %s131 = sand.u32 %s61, 1
          %s132 = sand.u32 %s61, 1
          %s133 = smul.addr %s132, 128
          %s134 = scalar_lea.vmem [#allocation2], %s133
          %s135 = smul.u32 2, %s9
          %s136 = smul.addr %s135, 4
          %s137 = scalar_lea.vmem %s2, %s136
          // Predicated region
          $region29: #{siamese_forward.4} parent=27 // pred_check
            _
          $region30: #{siamese_forward.4} parent=27 // pred_check_branch
            %139 = sbr.rel (0) target = $region32
          $region31: #{siamese_forward.4} parent=27 // pred_region
            // Predicated region
            $region33: #{siamese_forward.4} parent=31 // pred_check
              _
            $region34: #{siamese_forward.4} parent=31 // pred_check_branch
              %141 = sbr.rel (0) target = $region36
            $region35: #{siamese_forward.4} parent=31 // pred_region
              // Predicated region
              $region48: #{siamese_forward.4} parent=35 // pred_check
                _
              $region49: #{siamese_forward.4} parent=35 // pred_check_branch
                %186 = sbr.rel (0) target = $region51
              $region50: #{siamese_forward.4} parent=35 // pred_region
                loop: start=0, step=1, limit=1
                $region52: #{siamese_forward.4} parent=50 // loop_pre_header
                  _
                $region53: #{siamese_forward.4} parent=50 // loop_header
                  %s188 = sphi 0, %s192
                  %p189 = scmp.ge.s32.totalorder %s188, 1
                  %s193 = sphi %s137, %s137
                  %s194 = sphi %s134, %s134
                $region54: #{siamese_forward.4} parent=50 // loop_header_branch
                  %191 = sbr.rel (%p189) target = $region58
                $region55: #{siamese_forward.4} parent=50 // loop_body
                  %v195 = vld [vmem:[%s193] sm:$0xff]
                  %196 = vst [vmem:[%s194] sm:$0xff] %v195
                  %v197 = vld [vmem:[%s193 + $0x28] sm:$0xff]
                  %198 = vst [vmem:[%s194 + $0x8] sm:$0xff] %v197
                  %v199 = vld [vmem:[%s193 + $0x50] sm:$0xff]
                  %200 = vst [vmem:[%s194 + $0x10] sm:$0xff] %v199
                  %v201 = vld [vmem:[%s193 + $0x78] sm:$0xff]
                  %202 = vst [vmem:[%s194 + $0x18] sm:$0xff] %v201
                  %v203 = vld [vmem:[%s193 + $0xa0] sm:$0xff]
                  %204 = vst [vmem:[%s194 + $0x20] sm:$0xff] %v203
                  %v205 = vld [vmem:[%s193 + $0xc8] sm:$0xff]
                  %206 = vst [vmem:[%s194 + $0x28] sm:$0xff] %v205
                  %v207 = vld [vmem:[%s193 + $0xf0] sm:$0xff]
                  %208 = vst [vmem:[%s194 + $0x30] sm:$0xff] %v207
                  %v209 = vld [vmem:[%s193 + $0x118] sm:$0xff]
                  %210 = vst [vmem:[%s194 + $0x38] sm:$0xff] %v209
                  %v211 = vld [vmem:[%s193 + $0x140] sm:$0xff]
                  %212 = vst [vmem:[%s194 + $0x40] sm:$0xff] %v211
                  %v213 = vld [vmem:[%s193 + $0x168] sm:$0xff]
                  %214 = vst [vmem:[%s194 + $0x48] sm:$0xff] %v213
                  %v215 = vld [vmem:[%s193 + $0x190] sm:$0xff]
                  %216 = vst [vmem:[%s194 + $0x50] sm:$0xff] %v215
                  %v217 = vld [vmem:[%s193 + $0x1b8] sm:$0xff]
                  %218 = vst [vmem:[%s194 + $0x58] sm:$0xff] %v217
                  %v219 = vld [vmem:[%s193 + $0x1e0] sm:$0xff]
                  %220 = vst [vmem:[%s194 + $0x60] sm:$0xff] %v219
                  %v221 = vld [vmem:[%s193 + $0x208] sm:$0xff]
                  %222 = vst [vmem:[%s194 + $0x68] sm:$0xff] %v221
                  %v223 = vld [vmem:[%s193 + $0x230] sm:$0xff]
                  %224 = vst [vmem:[%s194 + $0x70] sm:$0xff] %v223
                  %v225 = vld [vmem:[%s193 + $0x258] sm:$0xff]
                  %226 = vst [vmem:[%s194 + $0x78] sm:$0xff] %v225
                $region56: #{siamese_forward.4} parent=50 // loop_footer
                  %s192 = sadd.s32 1, %s188
                $region57: #{siamese_forward.4} parent=50 // loop_footer_branch
                  %187 = sbr.rel target = $region53
                $region58: #{siamese_forward.4} parent=50 // loop_exit
                  _
              $region51: #{siamese_forward.4} parent=35 // pred_fallthru
                _
              // Predicated region
              $region59: #{siamese_forward.4} parent=35 // pred_check
                _
              $region60: #{siamese_forward.4} parent=35 // pred_check_branch
                %228 = sbr.rel target = $region62
              $region61: #{siamese_forward.4} parent=35 // pred_region
                _
              $region62: #{siamese_forward.4} parent=35 // pred_fallthru
                _
            $region36: #{siamese_forward.4} parent=31 // pred_fallthru
              _
            // Predicated region
            $region37: #{siamese_forward.4} parent=31 // pred_check
              _
            $region38: #{siamese_forward.4} parent=31 // pred_check_branch
              %143 = sbr.rel target = $region40
            $region39: #{siamese_forward.4} parent=31 // pred_region
              loop: start=0, step=1, limit=1
              $region41: #{siamese_forward.4} parent=39 // loop_pre_header
                _
              $region42: #{siamese_forward.4} parent=39 // loop_header
                %s146 = sphi 0, %s150
                %p147 = scmp.ge.s32.totalorder %s146, 1
                %s151 = sphi %s137, %s137
                %s152 = sphi %s134, %s134
              $region43: #{siamese_forward.4} parent=39 // loop_header_branch
                %149 = sbr.rel (%p147) target = $region47
              $region44: #{siamese_forward.4} parent=39 // loop_body
                %v153 = vld [vmem:[%s151] sm:$0xff]
                %154 = vst [vmem:[%s152] sm:$0xff] %v153
                %v155 = vld [vmem:[%s151 + $0x28] sm:$0xff]
                %156 = vst [vmem:[%s152 + $0x8] sm:$0xff] %v155
                %v157 = vld [vmem:[%s151 + $0x50] sm:$0xff]
                %158 = vst [vmem:[%s152 + $0x10] sm:$0xff] %v157
                %v159 = vld [vmem:[%s151 + $0x78] sm:$0xff]
                %160 = vst [vmem:[%s152 + $0x18] sm:$0xff] %v159
                %v161 = vld [vmem:[%s151 + $0xa0] sm:$0xff]
                %162 = vst [vmem:[%s152 + $0x20] sm:$0xff] %v161
                %v163 = vld [vmem:[%s151 + $0xc8] sm:$0xff]
                %164 = vst [vmem:[%s152 + $0x28] sm:$0xff] %v163
                %v165 = vld [vmem:[%s151 + $0xf0] sm:$0xff]
                %166 = vst [vmem:[%s152 + $0x30] sm:$0xff] %v165
                %v167 = vld [vmem:[%s151 + $0x118] sm:$0xff]
                %168 = vst [vmem:[%s152 + $0x38] sm:$0xff] %v167
                %v169 = vld [vmem:[%s151 + $0x140] sm:$0xff]
                %170 = vst [vmem:[%s152 + $0x40] sm:$0xff] %v169
                %v171 = vld [vmem:[%s151 + $0x168] sm:$0xff]
                %172 = vst [vmem:[%s152 + $0x48] sm:$0xff] %v171
                %v173 = vld [vmem:[%s151 + $0x190] sm:$0xff]
                %174 = vst [vmem:[%s152 + $0x50] sm:$0xff] %v173
                %v175 = vld [vmem:[%s151 + $0x1b8] sm:$0xff]
                %176 = vst [vmem:[%s152 + $0x58] sm:$0xff] %v175
                %v177 = vld [vmem:[%s151 + $0x1e0] sm:$0xff]
                %178 = vst [vmem:[%s152 + $0x60] sm:$0xff] %v177
                %v179 = vld [vmem:[%s151 + $0x208] sm:$0xff]
                %180 = vst [vmem:[%s152 + $0x68] sm:$0xff] %v179
                %v181 = vld [vmem:[%s151 + $0x230] sm:$0xff]
                %182 = vst [vmem:[%s152 + $0x70] sm:$0xff] %v181
                %v183 = vld [vmem:[%s151 + $0x258] sm:$0xff]
                %184 = vst [vmem:[%s152 + $0x78] sm:$0xff] %v183
              $region45: #{siamese_forward.4} parent=39 // loop_footer
                %s150 = sadd.s32 1, %s146
              $region46: #{siamese_forward.4} parent=39 // loop_footer_branch
                %145 = sbr.rel target = $region42
              $region47: #{siamese_forward.4} parent=39 // loop_exit
                _
            $region40: #{siamese_forward.4} parent=31 // pred_fallthru
              _
          $region32: #{siamese_forward.4} parent=27 // pred_fallthru
            _
          %229 = vnop
        $region28: #{siamese_forward.4} parent=23 // pred_fallthru
          _
      $region24: #{siamese_forward.4} parent=5 // pred_fallthru
        _
      %p230 = scmp.le.s32.totalorder 1, %s9
      %p231 = scmp.lt.s32.totalorder %s9, 6
      %p232 = pnand %p230, %p231
      %p233 = pneg %p232
      // Predicated region
      $region63: #{siamese_forward.4} parent=5 // pred_check
        _
      $region64: #{siamese_forward.4} parent=5 // pred_check_branch
        %235 = sbr.rel (%p232) target = $region66
      $region65: #{siamese_forward.4} parent=5 // pred_region
        %s236 = ssub.s32 %s9, 1
        %s237 = sand.u32 %s64, 1
        %s238 = sand.u32 %s64, 1
        %s239 = smul.addr %s238, 128
        %s240 = scalar_lea.vmem [#allocation2], %s239
        // Predicated region
        $region67: #{siamese_forward.4} parent=65 // pred_check
          %p241 = pneg %p77
        $region68: #{siamese_forward.4} parent=65 // pred_check_branch
          %243 = sbr.rel (%p241) target = $region70
        $region69: #{siamese_forward.4} parent=65 // pred_region
          _
        $region70: #{siamese_forward.4} parent=65 // pred_fallthru
          _
        %p244 = pneg %p30
        %p245 = pneg %p27
        %p246 = pneg %p51
        %p247 = pneg %p48
        %s248 = sand.u32 %s64, 1
        %s249 = sand.u32 %s64, 1
        %s250 = smul.addr %s249, 128
        %s251 = scalar_lea.vmem [#allocation2], %s250
        %p252 = pneg %p77
        %p253 = pneg %p74
        %p254 = pneg %p103
        %p255 = pneg %p100
        %s256 = sand.u32 %s90, 1
        %s257 = sand.u32 %s90, 1
        %s258 = smul.addr %s257, 16
        %s259 = scalar_lea.vmem [#allocation3], %s258
        %s260 = smul.u32 2, %s14
        %s261 = smul.u32 2, %s14
        %v263 = vld [vmem:[%s0] sm:$0xf]
        %v264 = vld [vmem:[%s0 + $0x4] sm:$0xf]
        %v265 = vld [vmem:[%s240] sm:$0xff]
        %v266 = vld [vmem:[%s240 + $0x8] sm:$0xff]
        %v267 = vld [vmem:[%s240 + $0x10] sm:$0xff]
        %v268 = vld [vmem:[%s240 + $0x18] sm:$0xff]
        %v269 = vld [vmem:[%s240 + $0x20] sm:$0xff]
        %v270 = vld [vmem:[%s240 + $0x28] sm:$0xff]
        %v271 = vld [vmem:[%s240 + $0x30] sm:$0xff]
        %v272 = vld [vmem:[%s240 + $0x38] sm:$0xff]
        %v273 = vld [vmem:[%s240 + $0x40] sm:$0xff]
        %v274 = vld [vmem:[%s240 + $0x48] sm:$0xff]
        %v275 = vld [vmem:[%s240 + $0x50] sm:$0xff]
        %v276 = vld [vmem:[%s240 + $0x58] sm:$0xff]
        %v277 = vld [vmem:[%s240 + $0x60] sm:$0xff]
        %v278 = vld [vmem:[%s240 + $0x68] sm:$0xff]
        %v279 = vld [vmem:[%s240 + $0x70] sm:$0xff]
        %v280 = vld [vmem:[%s240 + $0x78] sm:$0xff]
        %v281 = vld [vmem:[%s1] sm:$0xff]
        %v282 = vld [vmem:[%s1 + $0x8] sm:$0xff]
        %284 = vset.pattern.permute.xlu0 0
        %285 = vperm.xlu0 %284, %v281
        %v286 = vpop.permute.xlu0 %285
        %289 = vset.pattern.permute.xlu0 0
        %290 = vperm.xlu0 %289, %v282
        %v291 = vpop.permute.xlu0 %290
        %v295 = vunpack.c.l.b16 %v263
        %v296 = vunpack.c.l.b16 %v264
        %v297 = vpack.c.b16 %v296, %v295
        %v315 = vunpack.c.l.b16 %v265
        %v316 = vunpack.c.h.b16 %v265
        %v317 = vunpack.c.l.b16 %v266
        %v318 = vunpack.c.h.b16 %v266
        %v319 = vunpack.c.l.b16 %v267
        %v320 = vunpack.c.h.b16 %v267
        %v321 = vunpack.c.l.b16 %v268
        %v322 = vunpack.c.h.b16 %v268
        %v323 = vunpack.c.l.b16 %v269
        %v324 = vunpack.c.h.b16 %v269
        %v325 = vunpack.c.l.b16 %v270
        %v326 = vunpack.c.h.b16 %v270
        %v327 = vunpack.c.l.b16 %v271
        %v328 = vunpack.c.h.b16 %v271
        %v329 = vunpack.c.l.b16 %v272
        %v330 = vunpack.c.h.b16 %v272
        %v331 = vunpack.c.l.b16 %v273
        %v332 = vunpack.c.h.b16 %v273
        %v333 = vunpack.c.l.b16 %v274
        %v334 = vunpack.c.h.b16 %v274
        %v335 = vunpack.c.l.b16 %v275
        %v336 = vunpack.c.h.b16 %v275
        %v337 = vunpack.c.l.b16 %v276
        %v338 = vunpack.c.h.b16 %v276
        %v339 = vunpack.c.l.b16 %v277
        %v340 = vunpack.c.h.b16 %v277
        %v341 = vunpack.c.l.b16 %v278
        %v342 = vunpack.c.h.b16 %v278
        %v343 = vunpack.c.l.b16 %v279
        %v344 = vunpack.c.h.b16 %v279
        %v345 = vunpack.c.l.b16 %v280
        %v346 = vunpack.c.h.b16 %v280
        %v347 = vpack.c.b16 %v317, %v315
        %v348 = vpack.c.b16 %v318, %v316
        %v349 = vpack.c.b16 %v321, %v319
        %v350 = vpack.c.b16 %v322, %v320
        %v351 = vpack.c.b16 %v325, %v323
        %v352 = vpack.c.b16 %v326, %v324
        %v353 = vpack.c.b16 %v329, %v327
        %v354 = vpack.c.b16 %v330, %v328
        %v355 = vpack.c.b16 %v333, %v331
        %v356 = vpack.c.b16 %v334, %v332
        %v357 = vpack.c.b16 %v337, %v335
        %v358 = vpack.c.b16 %v338, %v336
        %v359 = vpack.c.b16 %v341, %v339
        %v360 = vpack.c.b16 %v342, %v340
        %v361 = vpack.c.b16 %v345, %v343
        %v362 = vpack.c.b16 %v346, %v344
        %379 = vmatprep.subr.bf16.mxu0 %v348
        %380 = vmatpush1.bf16.msra.mxu0 %v347
        %381 = vmatprep.subr.bf16.mxu0 %v350
        %382 = vmatpush1.bf16.msra.mxu0 %v349
        %383 = vmatprep.subr.bf16.mxu0 %v352
        %384 = vmatpush1.bf16.msra.mxu0 %v351
        %385 = vmatprep.subr.bf16.mxu0 %v354
        %386 = vmatpush1.bf16.msra.mxu0 %v353
        %387 = vmatprep.subr.bf16.mxu0 %v356
        %388 = vmatpush1.bf16.msra.mxu0 %v355
        %389 = vmatprep.subr.bf16.mxu0 %v358
        %390 = vmatpush1.bf16.msra.mxu0 %v357
        %391 = vmatprep.subr.bf16.mxu0 %v360
        %392 = vmatpush1.bf16.msra.mxu0 %v359
        %393 = vmatprep.subr.bf16.mxu0 %v362
        %394 = vmatpush1.bf16.msra.mxu0 %v361
        %395 = vmatprep.subr.bf16.mxu0 0
        %396 = vmatpush1.bf16.msra.mxu0 0
        %397 = vmatprep.subr.bf16.mxu0 0
        %398 = vmatpush1.bf16.msra.mxu0 0
        %399 = vmatprep.subr.bf16.mxu0 0
        %400 = vmatpush1.bf16.msra.mxu0 0
        %401 = vmatprep.subr.bf16.mxu0 0
        %402 = vmatpush1.bf16.msra.mxu0 0
        %403 = vmatprep.subr.bf16.mxu0 0
        %404 = vmatpush1.bf16.msra.mxu0 0
        %405 = vmatprep.subr.bf16.mxu0 0
        %406 = vmatpush1.bf16.msra.mxu0 0
        %407 = vmatprep.subr.bf16.mxu0 0
        %408 = vmatpush1.bf16.msra.mxu0 0
        %409 = vmatprep.subr.bf16.mxu0 0
        %410 = vmatpush1.bf16.msra.mxu0 0
        %411 = vmatprep.mubr.bf16.mxu0 0
        %412 = vmatmul.mubr.bf16.gmra.mrb[0].mxu0 %v297
        %v413 = vpop.f32.mrb[0].mxu0
        %v414 = vadd.f32 %v286, %v413
        %v415 = vpop.f32.mrb[0].mxu0
        %v416 = vadd.f32 %v286, %v415
        %v417 = vpop.f32.mrb[0].mxu0
        %v418 = vadd.f32 %v291, %v417
        %v419 = vpop.f32.mrb[0].mxu0
        %v420 = vadd.f32 %v291, %v419
        %421 = vdwg.mxu0
        %v422 = vmax.f32 %v414, 0.0
        %v423 = vmax.f32 %v416, 0.0
        %v424 = vmax.f32 %v418, 0.0
        %v425 = vmax.f32 %v420, 0.0
        %v426 = vpack.c.bf16 %v424, %v422
        %v427 = vpack.c.bf16 %v425, %v423
        %v430 = vunpack.c.l.b16 %v426
        %v431 = vunpack.c.l.b16 %v427
        %v432 = vunpack.c.h.b16 %v426
        %v433 = vunpack.c.h.b16 %v427
        %v434 = vpack.c.b16 %v431, %v430
        %v435 = vpack.c.b16 %v433, %v432
        %438 = vst [vmem:[%s259] sm:$0xff] %v434
        %439 = vst [vmem:[%s259 + $0x8] sm:$0xff] %v435
        %s440 = sand.u32 %s90, 1
        %s441 = sand.u32 %s90, 1
        %s442 = smul.addr %s441, 16
        %s443 = scalar_lea.vmem [#allocation3], %s442
        // Predicated region
        $region71: #{siamese_forward.4} parent=65 // pred_check
          %p444 = pneg %p100
        $region72: #{siamese_forward.4} parent=65 // pred_check_branch
          %446 = sbr.rel (%p444) target = $region74
        $region73: #{siamese_forward.4} parent=65 // pred_region
          %s447 = smul.u32 2, %s14
          %s448 = smul.addr %s447, 4
          %s449 = scalar_lea.vmem %s3, %s448
          // Predicated region
          $region75: #{siamese_forward.4} parent=73 // pred_check
            _
          $region76: #{siamese_forward.4} parent=73 // pred_check_branch
            %451 = sbr.rel (0) target = $region78
          $region77: #{siamese_forward.4} parent=73 // pred_region
            // Predicated region
            $region79: #{siamese_forward.4} parent=77 // pred_check
              _
            $region80: #{siamese_forward.4} parent=77 // pred_check_branch
              %453 = sbr.rel (0) target = $region82
            $region81: #{siamese_forward.4} parent=77 // pred_region
              // Predicated region
              $region94: #{siamese_forward.4} parent=81 // pred_check
                _
              $region95: #{siamese_forward.4} parent=81 // pred_check_branch
                %470 = sbr.rel (0) target = $region97
              $region96: #{siamese_forward.4} parent=81 // pred_region
                loop: start=0, step=1, limit=1
                $region98: #{siamese_forward.4} parent=96 // loop_pre_header
                  _
                $region99: #{siamese_forward.4} parent=96 // loop_header
                  %s472 = sphi 0, %s476
                  %p473 = scmp.ge.s32.totalorder %s472, 1
                  %s477 = sphi %s443, %s443
                  %s478 = sphi %s449, %s449
                $region100: #{siamese_forward.4} parent=96 // loop_header_branch
                  %475 = sbr.rel (%p473) target = $region104
                $region101: #{siamese_forward.4} parent=96 // loop_body
                  %v479 = vld [vmem:[%s477] sm:$0xff]
                  %480 = vst [vmem:[%s478] sm:$0xff] %v479
                  %v481 = vld [vmem:[%s477 + $0x8] sm:$0xff]
                  %482 = vst [vmem:[%s478 + $0x28] sm:$0xff] %v481
                $region102: #{siamese_forward.4} parent=96 // loop_footer
                  %s476 = sadd.s32 1, %s472
                $region103: #{siamese_forward.4} parent=96 // loop_footer_branch
                  %471 = sbr.rel target = $region99
                $region104: #{siamese_forward.4} parent=96 // loop_exit
                  _
              $region97: #{siamese_forward.4} parent=81 // pred_fallthru
                _
              // Predicated region
              $region105: #{siamese_forward.4} parent=81 // pred_check
                _
              $region106: #{siamese_forward.4} parent=81 // pred_check_branch
                %484 = sbr.rel target = $region108
              $region107: #{siamese_forward.4} parent=81 // pred_region
                _
              $region108: #{siamese_forward.4} parent=81 // pred_fallthru
                _
            $region82: #{siamese_forward.4} parent=77 // pred_fallthru
              _
            // Predicated region
            $region83: #{siamese_forward.4} parent=77 // pred_check
              _
            $region84: #{siamese_forward.4} parent=77 // pred_check_branch
              %455 = sbr.rel target = $region86
            $region85: #{siamese_forward.4} parent=77 // pred_region
              loop: start=0, step=1, limit=1
              $region87: #{siamese_forward.4} parent=85 // loop_pre_header
                _
              $region88: #{siamese_forward.4} parent=85 // loop_header
                %s458 = sphi 0, %s462
                %p459 = scmp.ge.s32.totalorder %s458, 1
                %s463 = sphi %s443, %s443
                %s464 = sphi %s449, %s449
              $region89: #{siamese_forward.4} parent=85 // loop_header_branch
                %461 = sbr.rel (%p459) target = $region93
              $region90: #{siamese_forward.4} parent=85 // loop_body
                %v465 = vld [vmem:[%s463] sm:$0xff]
                %466 = vst [vmem:[%s464] sm:$0xff] %v465
                %v467 = vld [vmem:[%s463 + $0x8] sm:$0xff]
                %468 = vst [vmem:[%s464 + $0x28] sm:$0xff] %v467
              $region91: #{siamese_forward.4} parent=85 // loop_footer
                %s462 = sadd.s32 1, %s458
              $region92: #{siamese_forward.4} parent=85 // loop_footer_branch
                %457 = sbr.rel target = $region88
              $region93: #{siamese_forward.4} parent=85 // loop_exit
                _
            $region86: #{siamese_forward.4} parent=77 // pred_fallthru
              _
          $region78: #{siamese_forward.4} parent=73 // pred_fallthru
            _
          %485 = vnop
        $region74: #{siamese_forward.4} parent=65 // pred_fallthru
          _
      $region66: #{siamese_forward.4} parent=5 // pred_fallthru
        _
      %p486 = scmp.le.s32.totalorder 2, %s9
      // Predicated region
      $region109: #{siamese_forward.4} parent=5 // pred_check
        %p487 = pneg %p486
      $region110: #{siamese_forward.4} parent=5 // pred_check_branch
        %489 = sbr.rel (%p487) target = $region112
      $region111: #{siamese_forward.4} parent=5 // pred_region
        %s490 = ssub.s32 %s9, 2
        // Predicated region
        $region113: #{siamese_forward.4} parent=111 // pred_check
          %p491 = pneg %p106
        $region114: #{siamese_forward.4} parent=111 // pred_check_branch
          %493 = sbr.rel (%p491) target = $region116
        $region115: #{siamese_forward.4} parent=111 // pred_region
          %s494 = sand.u32 %s91, 1
          %s495 = sand.u32 %s91, 1
          %s496 = smul.addr %s495, 16
          %s497 = scalar_lea.vmem [#allocation3], %s496
        $region116: #{siamese_forward.4} parent=111 // pred_fallthru
          _
      $region112: #{siamese_forward.4} parent=5 // pred_fallthru
        _
    $region6: #{siamese_forward.4} parent=1 // loop_footer
      %s13 = sadd.s32 1, %s9
    $region7: #{siamese_forward.4} parent=1 // loop_footer_branch
      %8 = sbr.rel target = $region3
    $region8: #{siamese_forward.4} parent=1 // loop_exit
      _

// kernel: siamese_forward.5
$region0: #{siamese_forward.5}
  #allocation0 [shape = 'u32[]', space=smem, size = 0x4, offset = 0x4, fixed_abs, tag = 'smem constant byte address 0x4 - core index']
  #allocation1 [shape = 'u32[144,128]{1,0:T(1,128)}', space=vmem, size = 0x12000, scoped, tag = 'internal scratch']
  %s0 = inlined_call_operand.vmem [shape: bf16[2,1,2304], index: 0, kind: input, shape index: {}]
  %s1 = inlined_call_operand.vmem [shape: bf16[2,2304,128], index: 1, kind: input, shape index: {}]
  %s2 = inlined_call_operand.vmem [shape: f32[2,1,128], index: 2, kind: output, shape index: {}]
  %s3 = sld [smem:[#allocation0]]
  $region41: #{siamese_forward.5} parent=0
    _
  %s5 = ssub.s32 1, %s3
  %s6 = scalar_select 0, %s5, %s3
  loop: start=0, step=1, limit=4
  $region2: #{siamese_forward.5} parent=0 // loop_pre_header
    _
  $region3: #{siamese_forward.5} parent=0 // loop_header
    %s8 = sphi 0, %s12
    %p9 = scmp.ge.s32.totalorder %s8, 4
    %s18 = sphi 0, %s20
    %s21 = sphi 0, %s18
    %s22 = sphi 0, %s21
    %s38 = sphi 0, %s22
    %s44 = sphi 0, %s46
    %s47 = sphi 0, %s44
    %s48 = sphi 0, %s47
    %s64 = sphi 0, %s48
    %s70 = sphi 0, %s72
    %s73 = sphi 0, %s70
    %s74 = sphi 0, %s73
    %s90 = sphi 0, %s74
  $region4: #{siamese_forward.5} parent=0 // loop_header_branch
    %11 = sbr.rel (%p9) target = $region8
  $region5: #{siamese_forward.5} parent=0 // loop_body
    %s13 = ssub.s32 %s8, 1
    %s14 = ssub.s32 %s8, 2
    %s15 = sadd.s32 %s8, 1
    %s16 = ssub.s32 %s8, %s15
    %p17 = scmp.eq.s32.totalorder %s16, 0
    %s19 = sadd.s32 %s18, 1
    %s20 = scalar_select %p17, %s18, %s19
    %p23 = pneg %p17
    %p24 = scmp.eq.s32.totalorder %s8, 1
    %p25 = por %p23, %p24
    %p26 = scmp.ne.s32.totalorder %s18, %s21
    %p27 = scmp.eq.s32.totalorder %s8, 0
    %p28 = por %p26, %p27
    %p29 = scmp.ne.s32.totalorder %s18, %s21
    %p30 = scmp.eq.s32.totalorder %s13, 1
    %p31 = por %p29, %p30
    %p32 = scmp.ne.s32.totalorder %s21, %s22
    %p33 = scmp.eq.s32.totalorder %s13, 0
    %p34 = por %p32, %p33
    %p35 = scmp.ne.s32.totalorder %s21, %s22
    %p36 = scmp.eq.s32.totalorder %s14, 1
    %p37 = por %p35, %p36
    %p39 = scmp.ne.s32.totalorder %s22, %s38
    %p40 = scmp.eq.s32.totalorder %s14, 0
    %p41 = por %p39, %p40
    %s42 = ssub.s32 %s8, %s15
    %p43 = scmp.eq.s32.totalorder %s42, 0
    %s45 = sadd.s32 %s44, 1
    %s46 = scalar_select %p43, %s44, %s45
    %p49 = pneg %p43
    %p50 = scmp.eq.s32.totalorder %s8, 1
    %p51 = por %p49, %p50
    %p52 = scmp.ne.s32.totalorder %s44, %s47
    %p53 = scmp.eq.s32.totalorder %s8, 0
    %p54 = por %p52, %p53
    %p55 = scmp.ne.s32.totalorder %s44, %s47
    %p56 = scmp.eq.s32.totalorder %s13, 1
    %p57 = por %p55, %p56
    %p58 = scmp.ne.s32.totalorder %s47, %s48
    %p59 = scmp.eq.s32.totalorder %s13, 0
    %p60 = por %p58, %p59
    %p61 = scmp.ne.s32.totalorder %s47, %s48
    %p62 = scmp.eq.s32.totalorder %s14, 1
    %p63 = por %p61, %p62
    %p65 = scmp.ne.s32.totalorder %s48, %s64
    %p66 = scmp.eq.s32.totalorder %s14, 0
    %p67 = por %p65, %p66
    %s68 = ssub.s32 %s8, %s15
    %p69 = scmp.eq.s32.totalorder %s68, 0
    %s71 = sadd.s32 %s70, 1
    %s72 = scalar_select %p69, %s70, %s71
    %p75 = pneg %p69
    %p76 = scmp.eq.s32.totalorder %s8, 1
    %p77 = por %p75, %p76
    %p78 = scmp.ne.s32.totalorder %s70, %s73
    %p79 = scmp.eq.s32.totalorder %s8, 0
    %p80 = por %p78, %p79
    %p81 = scmp.ne.s32.totalorder %s70, %s73
    %p82 = scmp.eq.s32.totalorder %s13, 1
    %p83 = por %p81, %p82
    %p84 = scmp.ne.s32.totalorder %s73, %s74
    %p85 = scmp.eq.s32.totalorder %s13, 0
    %p86 = por %p84, %p85
    %p87 = scmp.ne.s32.totalorder %s73, %s74
    %p88 = scmp.eq.s32.totalorder %s14, 1
    %p89 = por %p87, %p88
    %p91 = scmp.ne.s32.totalorder %s74, %s90
    %p92 = scmp.eq.s32.totalorder %s14, 0
    %p93 = por %p91, %p92
    %p94 = scmp.le.s32.totalorder 1, %s8
    %p95 = scmp.lt.s32.totalorder %s8, 3
    %p96 = pnand %p94, %p95
    %p97 = pneg %p96
    // Predicated region
    $region9: #{siamese_forward.5} parent=5 // pred_check
      _
    $region10: #{siamese_forward.5} parent=5 // pred_check_branch
      %99 = sbr.rel (%p96) target = $region12
    $region11: #{siamese_forward.5} parent=5 // pred_region
      %s100 = ssub.s32 %s8, 1
    $region12: #{siamese_forward.5} parent=5 // pred_fallthru
      _
    %p101 = scmp.lt.s32.totalorder %s8, 2
    // Predicated region
    $region13: #{siamese_forward.5} parent=5 // pred_check
      %p102 = pneg %p101
    $region14: #{siamese_forward.5} parent=5 // pred_check_branch
      %104 = sbr.rel (%p102) target = $region16
    $region15: #{siamese_forward.5} parent=5 // pred_region
      // Predicated region
      $region17: #{siamese_forward.5} parent=15 // pred_check
        %p105 = pneg %p28
      $region18: #{siamese_forward.5} parent=15 // pred_check_branch
        %107 = sbr.rel (%p105) target = $region20
      $region19: #{siamese_forward.5} parent=15 // pred_region
        %p108 = scmp.lt.s32.totalorder %s8, 1
        %s109 = scalar_select %p108, %s8, 1
        %s110 = smul.addr %s109, 18
        %s111 = scalar_lea.vmem %s0, %s110
      $region20: #{siamese_forward.5} parent=15 // pred_fallthru
        _
      // Predicated region
      $region21: #{siamese_forward.5} parent=15 // pred_check
        %p112 = pneg %p54
      $region22: #{siamese_forward.5} parent=15 // pred_check_branch
        %114 = sbr.rel (%p112) target = $region24
      $region23: #{siamese_forward.5} parent=15 // pred_region
        %p115 = scmp.lt.s32.totalorder %s8, 1
        %s116 = scalar_select %p115, %s8, 1
        %s117 = smul.addr %s116, 288
        %s118 = smul.addr %s117, 4
        %s119 = scalar_lea.vmem %s1, %s118
      $region24: #{siamese_forward.5} parent=15 // pred_fallthru
        _
    $region16: #{siamese_forward.5} parent=5 // pred_fallthru
      _
    %p120 = scmp.le.s32.totalorder 1, %s8
    %p121 = scmp.lt.s32.totalorder %s8, 3
    %p122 = pnand %p120, %p121
    %p123 = pneg %p122
    // Predicated region
    $region25: #{siamese_forward.5} parent=5 // pred_check
      _
    $region26: #{siamese_forward.5} parent=5 // pred_check_branch
      %125 = sbr.rel (%p122) target = $region28
    $region27: #{siamese_forward.5} parent=5 // pred_region
      %s126 = ssub.s32 %s8, 1
      %p127 = scmp.lt.s32.totalorder %s13, 1
      %s128 = scalar_select %p127, %s13, 1
      %s129 = smul.addr %s128, 18
      %s130 = scalar_lea.vmem %s0, %s129
      %p131 = pneg %p34
      %p132 = pneg %p31
      %p133 = scmp.lt.s32.totalorder %s13, 1
      %s134 = scalar_select %p133, %s13, 1
      %s135 = smul.addr %s134, 288
      %s136 = smul.addr %s135, 4
      %s137 = scalar_lea.vmem %s1, %s136
      %p138 = pneg %p60
      %p139 = pneg %p57
      %p140 = pneg %p86
      %p141 = pneg %p83
      %p142 = scmp.lt.s32.totalorder %s13, 1
      %s143 = scalar_select %p142, %s13, 1
      %s144 = scalar_lea.vmem %s2, %s143
      %p145 = scmp.lt.s32.totalorder %s13, 1
      %s146 = scalar_select %p145, %s13, 1
      %s147 = smul.addr %s146, 18
      %s148 = scalar_lea.vmem %s0, %s147
      %p149 = scmp.lt.s32.totalorder %s13, 1
      %s150 = scalar_select %p149, %s13, 1
      %s151 = smul.addr %s150, 288
      %s152 = smul.addr %s151, 4
      %s153 = scalar_lea.vmem %s1, %s152
      %p154 = scmp.lt.s32.totalorder %s13, 1
      %s155 = scalar_select %p154, %s13, 1
      %s156 = scalar_lea.vmem %s2, %s155
      %v158 = vld [vmem:[%s148] sm:$0xff]
      %v159 = vld [vmem:[%s148 + $0x8] sm:$0xff]
      %v160 = vld [vmem:[%s148 + $0x10] sm:$0x3]
      %v161 = vld [vmem:[%s153] sm:$0xf]
      %v162 = vld [vmem:[%s153 + $0x4] sm:$0xf]
      %v163 = vld [vmem:[%s153 + $0x8] sm:$0xf]
      %v164 = vld [vmem:[%s153 + $0xc] sm:$0xf]
      %v165 = vld [vmem:[%s153 + $0x10] sm:$0xf]
      %v166 = vld [vmem:[%s153 + $0x14] sm:$0xf]
      %v167 = vld [vmem:[%s153 + $0x18] sm:$0xf]
      %v168 = vld [vmem:[%s153 + $0x1c] sm:$0xf]
      %v169 = vld [vmem:[%s153 + $0x20] sm:$0xf]
      %v170 = vld [vmem:[%s153 + $0x24] sm:$0xf]
      %v171 = vld [vmem:[%s153 + $0x28] sm:$0xf]
      %v172 = vld [vmem:[%s153 + $0x2c] sm:$0xf]
      %v173 = vld [vmem:[%s153 + $0x30] sm:$0xf]
      %v174 = vld [vmem:[%s153 + $0x34] sm:$0xf]
      %v175 = vld [vmem:[%s153 + $0x38] sm:$0xf]
      %v176 = vld [vmem:[%s153 + $0x3c] sm:$0xf]
      %v177 = vld [vmem:[%s153 + $0x40] sm:$0xf]
      %v178 = vld [vmem:[%s153 + $0x44] sm:$0xf]
      %v179 = vld [vmem:[%s153 + $0x48] sm:$0xf]
      %v180 = vld [vmem:[%s153 + $0x4c] sm:$0xf]
      %v181 = vld [vmem:[%s153 + $0x50] sm:$0xf]
      %v182 = vld [vmem:[%s153 + $0x54] sm:$0xf]
      %v183 = vld [vmem:[%s153 + $0x58] sm:$0xf]
      %v184 = vld [vmem:[%s153 + $0x5c] sm:$0xf]
      %v185 = vld [vmem:[%s153 + $0x60] sm:$0xf]
      %v186 = vld [vmem:[%s153 + $0x64] sm:$0xf]
      %v187 = vld [vmem:[%s153 + $0x68] sm:$0xf]
      %v188 = vld [vmem:[%s153 + $0x6c] sm:$0xf]
      %v189 = vld [vmem:[%s153 + $0x70] sm:$0xf]
      %v190 = vld [vmem:[%s153 + $0x74] sm:$0xf]
      %v191 = vld [vmem:[%s153 + $0x78] sm:$0xf]
      %v192 = vld [vmem:[%s153 + $0x7c] sm:$0xf]
      %v193 = vld [vmem:[%s153 + $0x80] sm:$0xf]
      %v194 = vld [vmem:[%s153 + $0x84] sm:$0xf]
      %v195 = vld [vmem:[%s153 + $0x88] sm:$0xf]
      %v196 = vld [vmem:[%s153 + $0x8c] sm:$0xf]
      %v197 = vld [vmem:[%s153 + $0x90] sm:$0xf]
      %v198 = vld [vmem:[%s153 + $0x94] sm:$0xf]
      %v199 = vld [vmem:[%s153 + $0x98] sm:$0xf]
      %v200 = vld [vmem:[%s153 + $0x9c] sm:$0xf]
      %v201 = vld [vmem:[%s153 + $0xa0] sm:$0xf]
      %v202 = vld [vmem:[%s153 + $0xa4] sm:$0xf]
      %v203 = vld [vmem:[%s153 + $0xa8] sm:$0xf]
      %v204 = vld [vmem:[%s153 + $0xac] sm:$0xf]
      %v205 = vld [vmem:[%s153 + $0xb0] sm:$0xf]
      %v206 = vld [vmem:[%s153 + $0xb4] sm:$0xf]
      %v207 = vld [vmem:[%s153 + $0xb8] sm:$0xf]
      %v208 = vld [vmem:[%s153 + $0xbc] sm:$0xf]
      %v209 = vld [vmem:[%s153 + $0xc0] sm:$0xf]
      %v210 = vld [vmem:[%s153 + $0xc4] sm:$0xf]
      %v211 = vld [vmem:[%s153 + $0xc8] sm:$0xf]
      %v212 = vld [vmem:[%s153 + $0xcc] sm:$0xf]
      %v213 = vld [vmem:[%s153 + $0xd0] sm:$0xf]
      %v214 = vld [vmem:[%s153 + $0xd4] sm:$0xf]
      %v215 = vld [vmem:[%s153 + $0xd8] sm:$0xf]
      %v216 = vld [vmem:[%s153 + $0xdc] sm:$0xf]
      %v217 = vld [vmem:[%s153 + $0xe0] sm:$0xf]
      %v218 = vld [vmem:[%s153 + $0xe4] sm:$0xf]
      %v219 = vld [vmem:[%s153 + $0xe8] sm:$0xf]
      %v220 = vld [vmem:[%s153 + $0xec] sm:$0xf]
      %v221 = vld [vmem:[%s153 + $0xf0] sm:$0xf]
      %v222 = vld [vmem:[%s153 + $0xf4] sm:$0xf]
      %v223 = vld [vmem:[%s153 + $0xf8] sm:$0xf]
      %v224 = vld [vmem:[%s153 + $0xfc] sm:$0xf]
      %v225 = vld [vmem:[%s153 + $0x100] sm:$0xf]
      %v226 = vld [vmem:[%s153 + $0x104] sm:$0xf]
      %v227 = vld [vmem:[%s153 + $0x108] sm:$0xf]
      %v228 = vld [vmem:[%s153 + $0x10c] sm:$0xf]
      %v229 = vld [vmem:[%s153 + $0x110] sm:$0xf]
      %v230 = vld [vmem:[%s153 + $0x114] sm:$0xf]
      %v231 = vld [vmem:[%s153 + $0x118] sm:$0xf]
      %v232 = vld [vmem:[%s153 + $0x11c] sm:$0xf]
      %v233 = vld [vmem:[%s153 + $0x120] sm:$0xf]
      %v234 = vld [vmem:[%s153 + $0x124] sm:$0xf]
      %v235 = vld [vmem:[%s153 + $0x128] sm:$0xf]
      %v236 = vld [vmem:[%s153 + $0x12c] sm:$0xf]
      %v237 = vld [vmem:[%s153 + $0x130] sm:$0xf]
      %v238 = vld [vmem:[%s153 + $0x134] sm:$0xf]
      %v239 = vld [vmem:[%s153 + $0x138] sm:$0xf]
      %v240 = vld [vmem:[%s153 + $0x13c] sm:$0xf]
      %v241 = vld [vmem:[%s153 + $0x140] sm:$0xf]
      %v242 = vld [vmem:[%s153 + $0x144] sm:$0xf]
      %v243 = vld [vmem:[%s153 + $0x148] sm:$0xf]
      %v244 = vld [vmem:[%s153 + $0x14c] sm:$0xf]
      %v245 = vld [vmem:[%s153 + $0x150] sm:$0xf]
      %v246 = vld [vmem:[%s153 + $0x154] sm:$0xf]
      %v247 = vld [vmem:[%s153 + $0x158] sm:$0xf]
      %v248 = vld [vmem:[%s153 + $0x15c] sm:$0xf]
      %v249 = vld [vmem:[%s153 + $0x160] sm:$0xf]
      %v250 = vld [vmem:[%s153 + $0x164] sm:$0xf]
      %v251 = vld [vmem:[%s153 + $0x168] sm:$0xf]
      %v252 = vld [vmem:[%s153 + $0x16c] sm:$0xf]
      %v253 = vld [vmem:[%s153 + $0x170] sm:$0xf]
      %v254 = vld [vmem:[%s153 + $0x174] sm:$0xf]
      %v255 = vld [vmem:[%s153 + $0x178] sm:$0xf]
      %v256 = vld [vmem:[%s153 + $0x17c] sm:$0xf]
      %v257 = vld [vmem:[%s153 + $0x180] sm:$0xf]
      %v258 = vld [vmem:[%s153 + $0x184] sm:$0xf]
      %v259 = vld [vmem:[%s153 + $0x188] sm:$0xf]
      %v260 = vld [vmem:[%s153 + $0x18c] sm:$0xf]
      %v261 = vld [vmem:[%s153 + $0x190] sm:$0xf]
      %v262 = vld [vmem:[%s153 + $0x194] sm:$0xf]
      %v263 = vld [vmem:[%s153 + $0x198] sm:$0xf]
      %v264 = vld [vmem:[%s153 + $0x19c] sm:$0xf]
      %v265 = vld [vmem:[%s153 + $0x1a0] sm:$0xf]
      %v266 = vld [vmem:[%s153 + $0x1a4] sm:$0xf]
      %v267 = vld [vmem:[%s153 + $0x1a8] sm:$0xf]
      %v268 = vld [vmem:[%s153 + $0x1ac] sm:$0xf]
      %v269 = vld [vmem:[%s153 + $0x1b0] sm:$0xf]
      %v270 = vld [vmem:[%s153 + $0x1b4] sm:$0xf]
      %v271 = vld [vmem:[%s153 + $0x1b8] sm:$0xf]
      %v272 = vld [vmem:[%s153 + $0x1bc] sm:$0xf]
      %v273 = vld [vmem:[%s153 + $0x1c0] sm:$0xf]
      %v274 = vld [vmem:[%s153 + $0x1c4] sm:$0xf]
      %v275 = vld [vmem:[%s153 + $0x1c8] sm:$0xf]
      %v276 = vld [vmem:[%s153 + $0x1cc] sm:$0xf]
      %v277 = vld [vmem:[%s153 + $0x1d0] sm:$0xf]
      %v278 = vld [vmem:[%s153 + $0x1d4] sm:$0xf]
      %v279 = vld [vmem:[%s153 + $0x1d8] sm:$0xf]
      %v280 = vld [vmem:[%s153 + $0x1dc] sm:$0xf]
      %v281 = vld [vmem:[%s153 + $0x1e0] sm:$0xf]
      %v282 = vld [vmem:[%s153 + $0x1e4] sm:$0xf]
      %v283 = vld [vmem:[%s153 + $0x1e8] sm:$0xf]
      %v284 = vld [vmem:[%s153 + $0x1ec] sm:$0xf]
      %v285 = vld [vmem:[%s153 + $0x1f0] sm:$0xf]
      %v286 = vld [vmem:[%s153 + $0x1f4] sm:$0xf]
      %v287 = vld [vmem:[%s153 + $0x1f8] sm:$0xf]
      %v288 = vld [vmem:[%s153 + $0x1fc] sm:$0xf]
      %v289 = vld [vmem:[%s153 + $0x200] sm:$0xf]
      %v290 = vld [vmem:[%s153 + $0x204] sm:$0xf]
      %v291 = vld [vmem:[%s153 + $0x208] sm:$0xf]
      %v292 = vld [vmem:[%s153 + $0x20c] sm:$0xf]
      %v293 = vld [vmem:[%s153 + $0x210] sm:$0xf]
      %v294 = vld [vmem:[%s153 + $0x214] sm:$0xf]
      %v295 = vld [vmem:[%s153 + $0x218] sm:$0xf]
      %v296 = vld [vmem:[%s153 + $0x21c] sm:$0xf]
      %v297 = vld [vmem:[%s153 + $0x220] sm:$0xf]
      %v298 = vld [vmem:[%s153 + $0x224] sm:$0xf]
      %v299 = vld [vmem:[%s153 + $0x228] sm:$0xf]
      %v300 = vld [vmem:[%s153 + $0x22c] sm:$0xf]
      %v301 = vld [vmem:[%s153 + $0x230] sm:$0xf]
      %v302 = vld [vmem:[%s153 + $0x234] sm:$0xf]
      %v303 = vld [vmem:[%s153 + $0x238] sm:$0xf]
      %v304 = vld [vmem:[%s153 + $0x23c] sm:$0xf]
      %v305 = vld [vmem:[%s153 + $0x240] sm:$0xf]
      %v306 = vld [vmem:[%s153 + $0x244] sm:$0xf]
      %v307 = vld [vmem:[%s153 + $0x248] sm:$0xf]
      %v308 = vld [vmem:[%s153 + $0x24c] sm:$0xf]
      %v309 = vld [vmem:[%s153 + $0x250] sm:$0xf]
      %v310 = vld [vmem:[%s153 + $0x254] sm:$0xf]
      %v311 = vld [vmem:[%s153 + $0x258] sm:$0xf]
      %v312 = vld [vmem:[%s153 + $0x25c] sm:$0xf]
      %v313 = vld [vmem:[%s153 + $0x260] sm:$0xf]
      %v314 = vld [vmem:[%s153 + $0x264] sm:$0xf]
      %v315 = vld [vmem:[%s153 + $0x268] sm:$0xf]
      %v316 = vld [vmem:[%s153 + $0x26c] sm:$0xf]
      %v317 = vld [vmem:[%s153 + $0x270] sm:$0xf]
      %v318 = vld [vmem:[%s153 + $0x274] sm:$0xf]
      %v319 = vld [vmem:[%s153 + $0x278] sm:$0xf]
      %v320 = vld [vmem:[%s153 + $0x27c] sm:$0xf]
      %v321 = vld [vmem:[%s153 + $0x280] sm:$0xf]
      %v322 = vld [vmem:[%s153 + $0x284] sm:$0xf]
      %v323 = vld [vmem:[%s153 + $0x288] sm:$0xf]
      %v324 = vld [vmem:[%s153 + $0x28c] sm:$0xf]
      %v325 = vld [vmem:[%s153 + $0x290] sm:$0xf]
      %v326 = vld [vmem:[%s153 + $0x294] sm:$0xf]
      %v327 = vld [vmem:[%s153 + $0x298] sm:$0xf]
      %v328 = vld [vmem:[%s153 + $0x29c] sm:$0xf]
      %v329 = vld [vmem:[%s153 + $0x2a0] sm:$0xf]
      %v330 = vld [vmem:[%s153 + $0x2a4] sm:$0xf]
      %v331 = vld [vmem:[%s153 + $0x2a8] sm:$0xf]
      %v332 = vld [vmem:[%s153 + $0x2ac] sm:$0xf]
      %v333 = vld [vmem:[%s153 + $0x2b0] sm:$0xf]
      %v334 = vld [vmem:[%s153 + $0x2b4] sm:$0xf]
      %v335 = vld [vmem:[%s153 + $0x2b8] sm:$0xf]
      %v336 = vld [vmem:[%s153 + $0x2bc] sm:$0xf]
      %v337 = vld [vmem:[%s153 + $0x2c0] sm:$0xf]
      %v338 = vld [vmem:[%s153 + $0x2c4] sm:$0xf]
      %v339 = vld [vmem:[%s153 + $0x2c8] sm:$0xf]
      %v340 = vld [vmem:[%s153 + $0x2cc] sm:$0xf]
      %v341 = vld [vmem:[%s153 + $0x2d0] sm:$0xf]
      %v342 = vld [vmem:[%s153 + $0x2d4] sm:$0xf]
      %v343 = vld [vmem:[%s153 + $0x2d8] sm:$0xf]
      %v344 = vld [vmem:[%s153 + $0x2dc] sm:$0xf]
      %v345 = vld [vmem:[%s153 + $0x2e0] sm:$0xf]
      %v346 = vld [vmem:[%s153 + $0x2e4] sm:$0xf]
      %v347 = vld [vmem:[%s153 + $0x2e8] sm:$0xf]
      %v348 = vld [vmem:[%s153 + $0x2ec] sm:$0xf]
      %v349 = vld [vmem:[%s153 + $0x2f0] sm:$0xf]
      %v350 = vld [vmem:[%s153 + $0x2f4] sm:$0xf]
      %v351 = vld [vmem:[%s153 + $0x2f8] sm:$0xf]
      %v352 = vld [vmem:[%s153 + $0x2fc] sm:$0xf]
      %v353 = vld [vmem:[%s153 + $0x300] sm:$0xf]
      %v354 = vld [vmem:[%s153 + $0x304] sm:$0xf]
      %v355 = vld [vmem:[%s153 + $0x308] sm:$0xf]
      %v356 = vld [vmem:[%s153 + $0x30c] sm:$0xf]
      %v357 = vld [vmem:[%s153 + $0x310] sm:$0xf]
      %v358 = vld [vmem:[%s153 + $0x314] sm:$0xf]
      %v359 = vld [vmem:[%s153 + $0x318] sm:$0xf]
      %v360 = vld [vmem:[%s153 + $0x31c] sm:$0xf]
      %v361 = vld [vmem:[%s153 + $0x320] sm:$0xf]
      %v362 = vld [vmem:[%s153 + $0x324] sm:$0xf]
      %v363 = vld [vmem:[%s153 + $0x328] sm:$0xf]
      %v364 = vld [vmem:[%s153 + $0x32c] sm:$0xf]
      %v365 = vld [vmem:[%s153 + $0x330] sm:$0xf]
      %v366 = vld [vmem:[%s153 + $0x334] sm:$0xf]
      %v367 = vld [vmem:[%s153 + $0x338] sm:$0xf]
      %v368 = vld [vmem:[%s153 + $0x33c] sm:$0xf]
      %v369 = vld [vmem:[%s153 + $0x340] sm:$0xf]
      %v370 = vld [vmem:[%s153 + $0x344] sm:$0xf]
      %v371 = vld [vmem:[%s153 + $0x348] sm:$0xf]
      %v372 = vld [vmem:[%s153 + $0x34c] sm:$0xf]
      %v373 = vld [vmem:[%s153 + $0x350] sm:$0xf]
      %v374 = vld [vmem:[%s153 + $0x354] sm:$0xf]
      %v375 = vld [vmem:[%s153 + $0x358] sm:$0xf]
      %v376 = vld [vmem:[%s153 + $0x35c] sm:$0xf]
      %v377 = vld [vmem:[%s153 + $0x360] sm:$0xf]
      %v378 = vld [vmem:[%s153 + $0x364] sm:$0xf]
      %v379 = vld [vmem:[%s153 + $0x368] sm:$0xf]
      %v380 = vld [vmem:[%s153 + $0x36c] sm:$0xf]
      %v381 = vld [vmem:[%s153 + $0x370] sm:$0xf]
      %v382 = vld [vmem:[%s153 + $0x374] sm:$0xf]
      %v383 = vld [vmem:[%s153 + $0x378] sm:$0xf]
      %v384 = vld [vmem:[%s153 + $0x37c] sm:$0xf]
      %v385 = vld [vmem:[%s153 + $0x380] sm:$0xf]
      %v386 = vld [vmem:[%s153 + $0x384] sm:$0xf]
      %v387 = vld [vmem:[%s153 + $0x388] sm:$0xf]
      %v388 = vld [vmem:[%s153 + $0x38c] sm:$0xf]
      %v389 = vld [vmem:[%s153 + $0x390] sm:$0xf]
      %v390 = vld [vmem:[%s153 + $0x394] sm:$0xf]
      %v391 = vld [vmem:[%s153 + $0x398] sm:$0xf]
      %v392 = vld [vmem:[%s153 + $0x39c] sm:$0xf]
      %v393 = vld [vmem:[%s153 + $0x3a0] sm:$0xf]
      %v394 = vld [vmem:[%s153 + $0x3a4] sm:$0xf]
      %v395 = vld [vmem:[%s153 + $0x3a8] sm:$0xf]
      %v396 = vld [vmem:[%s153 + $0x3ac] sm:$0xf]
      %v397 = vld [vmem:[%s153 + $0x3b0] sm:$0xf]
      %v398 = vld [vmem:[%s153 + $0x3b4] sm:$0xf]
      %v399 = vld [vmem:[%s153 + $0x3b8] sm:$0xf]
      %v400 = vld [vmem:[%s153 + $0x3bc] sm:$0xf]
      %v401 = vld [vmem:[%s153 + $0x3c0] sm:$0xf]
      %v402 = vld [vmem:[%s153 + $0x3c4] sm:$0xf]
      %v403 = vld [vmem:[%s153 + $0x3c8] sm:$0xf]
      %v404 = vld [vmem:[%s153 + $0x3cc] sm:$0xf]
      %v405 = vld [vmem:[%s153 + $0x3d0] sm:$0xf]
      %v406 = vld [vmem:[%s153 + $0x3d4] sm:$0xf]
      %v407 = vld [vmem:[%s153 + $0x3d8] sm:$0xf]
      %v408 = vld [vmem:[%s153 + $0x3dc] sm:$0xf]
      %v409 = vld [vmem:[%s153 + $0x3e0] sm:$0xf]
      %v410 = vld [vmem:[%s153 + $0x3e4] sm:$0xf]
      %v411 = vld [vmem:[%s153 + $0x3e8] sm:$0xf]
      %v412 = vld [vmem:[%s153 + $0x3ec] sm:$0xf]
      %v413 = vld [vmem:[%s153 + $0x3f0] sm:$0xf]
      %v414 = vld [vmem:[%s153 + $0x3f4] sm:$0xf]
      %v415 = vld [vmem:[%s153 + $0x3f8] sm:$0xf]
      %v416 = vld [vmem:[%s153 + $0x3fc] sm:$0xf]
      %v417 = vld [vmem:[%s153 + $0x400] sm:$0xf]
      %v418 = vld [vmem:[%s153 + $0x404] sm:$0xf]
      %v419 = vld [vmem:[%s153 + $0x408] sm:$0xf]
      %v420 = vld [vmem:[%s153 + $0x40c] sm:$0xf]
      %v421 = vld [vmem:[%s153 + $0x410] sm:$0xf]
      %v422 = vld [vmem:[%s153 + $0x414] sm:$0xf]
      %v423 = vld [vmem:[%s153 + $0x418] sm:$0xf]
      %v424 = vld [vmem:[%s153 + $0x41c] sm:$0xf]
      %v425 = vld [vmem:[%s153 + $0x420] sm:$0xf]
      %v426 = vld [vmem:[%s153 + $0x424] sm:$0xf]
      %v427 = vld [vmem:[%s153 + $0x428] sm:$0xf]
      %v428 = vld [vmem:[%s153 + $0x42c] sm:$0xf]
      %v429 = vld [vmem:[%s153 + $0x430] sm:$0xf]
      %v430 = vld [vmem:[%s153 + $0x434] sm:$0xf]
      %v431 = vld [vmem:[%s153 + $0x438] sm:$0xf]
      %v432 = vld [vmem:[%s153 + $0x43c] sm:$0xf]
      %v433 = vld [vmem:[%s153 + $0x440] sm:$0xf]
      %v434 = vld [vmem:[%s153 + $0x444] sm:$0xf]
      %v435 = vld [vmem:[%s153 + $0x448] sm:$0xf]
      %v436 = vld [vmem:[%s153 + $0x44c] sm:$0xf]
      %v437 = vld [vmem:[%s153 + $0x450] sm:$0xf]
      %v438 = vld [vmem:[%s153 + $0x454] sm:$0xf]
      %v439 = vld [vmem:[%s153 + $0x458] sm:$0xf]
      %v440 = vld [vmem:[%s153 + $0x45c] sm:$0xf]
      %v441 = vld [vmem:[%s153 + $0x460] sm:$0xf]
      %v442 = vld [vmem:[%s153 + $0x464] sm:$0xf]
      %v443 = vld [vmem:[%s153 + $0x468] sm:$0xf]
      %v444 = vld [vmem:[%s153 + $0x46c] sm:$0xf]
      %v445 = vld [vmem:[%s153 + $0x470] sm:$0xf]
      %v446 = vld [vmem:[%s153 + $0x474] sm:$0xf]
      %v447 = vld [vmem:[%s153 + $0x478] sm:$0xf]
      %v448 = vld [vmem:[%s153 + $0x47c] sm:$0xf]
      %v452 = vcombine.high %v158, %v158
      %v454 = vunpack.c.l.s4 1966171168
      %v455 = vunpack.c.0.s8 %v454
      %v456 = vlaneseq
      %v457 = vshrl.u32 %v456, 7
      %v458 = vsub.s32 %v455, %v457
      %v459 = vrot.slane %v158, %v458
      %v461 = vunpack.c.l.s4 1966171168
      %v462 = vunpack.c.0.s8 %v461
      %v463 = vlaneseq
      %v464 = vshrl.u32 %v463, 7
      %v465 = vsub.s32 %v462, %v464
      %v466 = vrot.slane %v452, %v465
      %v467 = vcombine.high %v459, %v459
      %v468 = vcombine.high %v466, %v466
      %v470 = vunpack.c.l.s4 1966171168
      %v471 = vunpack.c.0.s8 %v470
      %v472 = vlaneseq
      %v473 = vshrl.u32 %v472, 7
      %v474 = vsub.s32 %v471, %v473
      %v475 = vrot.slane %v459, %v474
      %v477 = vunpack.c.l.s4 1966171168
      %v478 = vunpack.c.0.s8 %v477
      %v479 = vlaneseq
      %v480 = vshrl.u32 %v479, 7
      %v481 = vsub.s32 %v478, %v480
      %v482 = vrot.slane %v466, %v481
      %v484 = vunpack.c.l.s4 1966171168
      %v485 = vunpack.c.0.s8 %v484
      %v486 = vlaneseq
      %v487 = vshrl.u32 %v486, 7
      %v488 = vsub.s32 %v485, %v487
      %v489 = vrot.slane %v467, %v488
      %v491 = vunpack.c.l.s4 1966171168
      %v492 = vunpack.c.0.s8 %v491
      %v493 = vlaneseq
      %v494 = vshrl.u32 %v493, 7
      %v495 = vsub.s32 %v492, %v494
      %v496 = vrot.slane %v468, %v495
      %v497 = vcombine.high %v475, %v475
      %v498 = vcombine.high %v482, %v482
      %v499 = vcombine.high %v489, %v489
      %v500 = vcombine.high %v496, %v496
      %v501 = vcombine.high %v159, %v159
      %v503 = vunpack.c.l.s4 1966171168
      %v504 = vunpack.c.0.s8 %v503
      %v505 = vlaneseq
      %v506 = vshrl.u32 %v505, 7
      %v507 = vsub.s32 %v504, %v506
      %v508 = vrot.slane %v159, %v507
      %v510 = vunpack.c.l.s4 1966171168
      %v511 = vunpack.c.0.s8 %v510
      %v512 = vlaneseq
      %v513 = vshrl.u32 %v512, 7
      %v514 = vsub.s32 %v511, %v513
      %v515 = vrot.slane %v501, %v514
      %v516 = vcombine.high %v508, %v508
      %v517 = vcombine.high %v515, %v515
      %v519 = vunpack.c.l.s4 1966171168
      %v520 = vunpack.c.0.s8 %v519
      %v521 = vlaneseq
      %v522 = vshrl.u32 %v521, 7
      %v523 = vsub.s32 %v520, %v522
      %v524 = vrot.slane %v508, %v523
      %v526 = vunpack.c.l.s4 1966171168
      %v527 = vunpack.c.0.s8 %v526
      %v528 = vlaneseq
      %v529 = vshrl.u32 %v528, 7
      %v530 = vsub.s32 %v527, %v529
      %v531 = vrot.slane %v515, %v530
      %v533 = vunpack.c.l.s4 1966171168
      %v534 = vunpack.c.0.s8 %v533
      %v535 = vlaneseq
      %v536 = vshrl.u32 %v535, 7
      %v537 = vsub.s32 %v534, %v536
      %v538 = vrot.slane %v516, %v537
      %v540 = vunpack.c.l.s4 1966171168
      %v541 = vunpack.c.0.s8 %v540
      %v542 = vlaneseq
      %v543 = vshrl.u32 %v542, 7
      %v544 = vsub.s32 %v541, %v543
      %v545 = vrot.slane %v517, %v544
      %v546 = vcombine.high %v524, %v524
      %v547 = vcombine.high %v531, %v531
      %v548 = vcombine.high %v538, %v538
      %v549 = vcombine.high %v545, %v545
      %v551 = vunpack.c.l.s4 1966171168
      %v552 = vunpack.c.0.s8 %v551
      %v553 = vlaneseq
      %v554 = vshrl.u32 %v553, 7
      %v555 = vsub.s32 %v552, %v554
      %v556 = vrot.slane %v160, %v555
      %v557 = vcombine.high %v556, %v556
      %v559 = vunpack.c.l.s4 1966171168
      %v560 = vunpack.c.0.s8 %v559
      %v561 = vlaneseq
      %v562 = vshrl.u32 %v561, 7
      %v563 = vsub.s32 %v560, %v562
      %v564 = vrot.slane %v556, %v563
      %v566 = vunpack.c.l.s4 1966171168
      %v567 = vunpack.c.0.s8 %v566
      %v568 = vlaneseq
      %v569 = vshrl.u32 %v568, 7
      %v570 = vsub.s32 %v567, %v569
      %v571 = vrot.slane %v557, %v570
      %v878 = vunpack.c.l.b16 %v161
      %v879 = vunpack.c.l.b16 %v162
      %v880 = vunpack.c.l.b16 %v163
      %v881 = vunpack.c.l.b16 %v164
      %v882 = vunpack.c.l.b16 %v165
      %v883 = vunpack.c.l.b16 %v166
      %v884 = vunpack.c.l.b16 %v167
      %v885 = vunpack.c.l.b16 %v168
      %v886 = vunpack.c.l.b16 %v169
      %v887 = vunpack.c.l.b16 %v170
      %v888 = vunpack.c.l.b16 %v171
      %v889 = vunpack.c.l.b16 %v172
      %v890 = vunpack.c.l.b16 %v173
      %v891 = vunpack.c.l.b16 %v174
      %v892 = vunpack.c.l.b16 %v175
      %v893 = vunpack.c.l.b16 %v176
      %v894 = vunpack.c.l.b16 %v177
      %v895 = vunpack.c.l.b16 %v178
      %v896 = vunpack.c.l.b16 %v179
      %v897 = vunpack.c.l.b16 %v180
      %v898 = vunpack.c.l.b16 %v181
      %v899 = vunpack.c.l.b16 %v182
      %v900 = vunpack.c.l.b16 %v183
      %v901 = vunpack.c.l.b16 %v184
      %v902 = vunpack.c.l.b16 %v185
      %v903 = vunpack.c.l.b16 %v186
      %v904 = vunpack.c.l.b16 %v187
      %v905 = vunpack.c.l.b16 %v188
      %v906 = vunpack.c.l.b16 %v189
      %v907 = vunpack.c.l.b16 %v190
      %v908 = vunpack.c.l.b16 %v191
      %v909 = vunpack.c.l.b16 %v192
      %v910 = vunpack.c.l.b16 %v193
      %v911 = vunpack.c.l.b16 %v194
      %v912 = vunpack.c.l.b16 %v195
      %v913 = vunpack.c.l.b16 %v196
      %v914 = vunpack.c.l.b16 %v197
      %v915 = vunpack.c.l.b16 %v198
      %v916 = vunpack.c.l.b16 %v199
      %v917 = vunpack.c.l.b16 %v200
      %v918 = vunpack.c.l.b16 %v201
      %v919 = vunpack.c.l.b16 %v202
      %v920 = vunpack.c.l.b16 %v203
      %v921 = vunpack.c.l.b16 %v204
      %v922 = vunpack.c.l.b16 %v205
      %v923 = vunpack.c.l.b16 %v206
      %v924 = vunpack.c.l.b16 %v207
      %v925 = vunpack.c.l.b16 %v208
      %v926 = vunpack.c.l.b16 %v209
      %v927 = vunpack.c.l.b16 %v210
      %v928 = vunpack.c.l.b16 %v211
      %v929 = vunpack.c.l.b16 %v212
      %v930 = vunpack.c.l.b16 %v213
      %v931 = vunpack.c.l.b16 %v214
      %v932 = vunpack.c.l.b16 %v215
      %v933 = vunpack.c.l.b16 %v216
      %v934 = vunpack.c.l.b16 %v217
      %v935 = vunpack.c.l.b16 %v218
      %v936 = vunpack.c.l.b16 %v219
      %v937 = vunpack.c.l.b16 %v220
      %v938 = vunpack.c.l.b16 %v221
      %v939 = vunpack.c.l.b16 %v222
      %v940 = vunpack.c.l.b16 %v223
      %v941 = vunpack.c.l.b16 %v224
      %v942 = vunpack.c.l.b16 %v225
      %v943 = vunpack.c.l.b16 %v226
      %v944 = vunpack.c.l.b16 %v227
      %v945 = vunpack.c.l.b16 %v228
      %v946 = vunpack.c.l.b16 %v229
      %v947 = vunpack.c.l.b16 %v230
      %v948 = vunpack.c.l.b16 %v231
      %v949 = vunpack.c.l.b16 %v232
      %v950 = vunpack.c.l.b16 %v233
      %v951 = vunpack.c.l.b16 %v234
      %v952 = vunpack.c.l.b16 %v235
      %v953 = vunpack.c.l.b16 %v236
      %v954 = vunpack.c.l.b16 %v237
      %v955 = vunpack.c.l.b16 %v238
      %v956 = vunpack.c.l.b16 %v239
      %v957 = vunpack.c.l.b16 %v240
      %v958 = vunpack.c.l.b16 %v241
      %v959 = vunpack.c.l.b16 %v242
      %v960 = vunpack.c.l.b16 %v243
      %v961 = vunpack.c.l.b16 %v244
      %v962 = vunpack.c.l.b16 %v245
      %v963 = vunpack.c.l.b16 %v246
      %v964 = vunpack.c.l.b16 %v247
      %v965 = vunpack.c.l.b16 %v248
      %v966 = vunpack.c.l.b16 %v249
      %v967 = vunpack.c.l.b16 %v250
      %v968 = vunpack.c.l.b16 %v251
      %v969 = vunpack.c.l.b16 %v252
      %v970 = vunpack.c.l.b16 %v253
      %v971 = vunpack.c.l.b16 %v254
      %v972 = vunpack.c.l.b16 %v255
      %v973 = vunpack.c.l.b16 %v256
      %v974 = vunpack.c.l.b16 %v257
      %v975 = vunpack.c.l.b16 %v258
      %v976 = vunpack.c.l.b16 %v259
      %v977 = vunpack.c.l.b16 %v260
      %v978 = vunpack.c.l.b16 %v261
      %v979 = vunpack.c.l.b16 %v262
      %v980 = vunpack.c.l.b16 %v263
      %v981 = vunpack.c.l.b16 %v264
      %v982 = vunpack.c.l.b16 %v265
      %v983 = vunpack.c.l.b16 %v266
      %v984 = vunpack.c.l.b16 %v267
      %v985 = vunpack.c.l.b16 %v268
      %v986 = vunpack.c.l.b16 %v269
      %v987 = vunpack.c.l.b16 %v270
      %v988 = vunpack.c.l.b16 %v271
      %v989 = vunpack.c.l.b16 %v272
      %v990 = vunpack.c.l.b16 %v273
      %v991 = vunpack.c.l.b16 %v274
      %v992 = vunpack.c.l.b16 %v275
      %v993 = vunpack.c.l.b16 %v276
      %v994 = vunpack.c.l.b16 %v277
      %v995 = vunpack.c.l.b16 %v278
      %v996 = vunpack.c.l.b16 %v279
      %v997 = vunpack.c.l.b16 %v280
      %v998 = vunpack.c.l.b16 %v281
      %v999 = vunpack.c.l.b16 %v282
      %v1000 = vunpack.c.l.b16 %v283
      %v1001 = vunpack.c.l.b16 %v284
      %v1002 = vunpack.c.l.b16 %v285
      %v1003 = vunpack.c.l.b16 %v286
      %v1004 = vunpack.c.l.b16 %v287
      %v1005 = vunpack.c.l.b16 %v288
      %v1006 = vunpack.c.l.b16 %v289
      %v1007 = vunpack.c.l.b16 %v290
      %v1008 = vunpack.c.l.b16 %v291
      %v1009 = vunpack.c.l.b16 %v292
      %v1010 = vunpack.c.l.b16 %v293
      %v1011 = vunpack.c.l.b16 %v294
      %v1012 = vunpack.c.l.b16 %v295
      %v1013 = vunpack.c.l.b16 %v296
      %v1014 = vunpack.c.l.b16 %v297
      %v1015 = vunpack.c.l.b16 %v298
      %v1016 = vunpack.c.l.b16 %v299
      %v1017 = vunpack.c.l.b16 %v300
      %v1018 = vunpack.c.l.b16 %v301
      %v1019 = vunpack.c.l.b16 %v302
      %v1020 = vunpack.c.l.b16 %v303
      %v1021 = vunpack.c.l.b16 %v304
      %v1022 = vunpack.c.l.b16 %v305
      %v1023 = vunpack.c.l.b16 %v306
      %v1024 = vunpack.c.l.b16 %v307
      %v1025 = vunpack.c.l.b16 %v308
      %v1026 = vunpack.c.l.b16 %v309
      %v1027 = vunpack.c.l.b16 %v310
      %v1028 = vunpack.c.l.b16 %v311
      %v1029 = vunpack.c.l.b16 %v312
      %v1030 = vunpack.c.l.b16 %v313
      %v1031 = vunpack.c.l.b16 %v314
      %v1032 = vunpack.c.l.b16 %v315
      %v1033 = vunpack.c.l.b16 %v316
      %v1034 = vunpack.c.l.b16 %v317
      %v1035 = vunpack.c.l.b16 %v318
      %v1036 = vunpack.c.l.b16 %v319
      %v1037 = vunpack.c.l.b16 %v320
      %v1038 = vunpack.c.l.b16 %v321
      %v1039 = vunpack.c.l.b16 %v322
      %v1040 = vunpack.c.l.b16 %v323
      %v1041 = vunpack.c.l.b16 %v324
      %v1042 = vunpack.c.l.b16 %v325
      %v1043 = vunpack.c.l.b16 %v326
      %v1044 = vunpack.c.l.b16 %v327
      %v1045 = vunpack.c.l.b16 %v328
      %v1046 = vunpack.c.l.b16 %v329
      %v1047 = vunpack.c.l.b16 %v330
      %v1048 = vunpack.c.l.b16 %v331
      %v1049 = vunpack.c.l.b16 %v332
      %v1050 = vunpack.c.l.b16 %v333
      %v1051 = vunpack.c.l.b16 %v334
      %v1052 = vunpack.c.l.b16 %v335
      %v1053 = vunpack.c.l.b16 %v336
      %v1054 = vunpack.c.l.b16 %v337
      %v1055 = vunpack.c.l.b16 %v338
      %v1056 = vunpack.c.l.b16 %v339
      %v1057 = vunpack.c.l.b16 %v340
      %v1058 = vunpack.c.l.b16 %v341
      %v1059 = vunpack.c.l.b16 %v342
      %v1060 = vunpack.c.l.b16 %v343
      %v1061 = vunpack.c.l.b16 %v344
      %v1062 = vunpack.c.l.b16 %v345
      %v1063 = vunpack.c.l.b16 %v346
      %v1064 = vunpack.c.l.b16 %v347
      %v1065 = vunpack.c.l.b16 %v348
      %v1066 = vunpack.c.l.b16 %v349
      %v1067 = vunpack.c.l.b16 %v350
      %v1068 = vunpack.c.l.b16 %v351
      %v1069 = vunpack.c.l.b16 %v352
      %v1070 = vunpack.c.l.b16 %v353
      %v1071 = vunpack.c.l.b16 %v354
      %v1072 = vunpack.c.l.b16 %v355
      %v1073 = vunpack.c.l.b16 %v356
      %v1074 = vunpack.c.l.b16 %v357
      %v1075 = vunpack.c.l.b16 %v358
      %v1076 = vunpack.c.l.b16 %v359
      %v1077 = vunpack.c.l.b16 %v360
      %v1078 = vunpack.c.l.b16 %v361
      %v1079 = vunpack.c.l.b16 %v362
      %v1080 = vunpack.c.l.b16 %v363
      %v1081 = vunpack.c.l.b16 %v364
      %v1082 = vunpack.c.l.b16 %v365
      %v1083 = vunpack.c.l.b16 %v366
      %v1084 = vunpack.c.l.b16 %v367
      %v1085 = vunpack.c.l.b16 %v368
      %v1086 = vunpack.c.l.b16 %v369
      %v1087 = vunpack.c.l.b16 %v370
      %v1088 = vunpack.c.l.b16 %v371
      %v1089 = vunpack.c.l.b16 %v372
      %v1090 = vunpack.c.l.b16 %v373
      %v1091 = vunpack.c.l.b16 %v374
      %v1092 = vunpack.c.l.b16 %v375
      %v1093 = vunpack.c.l.b16 %v376
      %v1094 = vunpack.c.l.b16 %v377
      %v1095 = vunpack.c.l.b16 %v378
      %v1096 = vunpack.c.l.b16 %v379
      %v1097 = vunpack.c.l.b16 %v380
      %v1098 = vunpack.c.l.b16 %v381
      %v1099 = vunpack.c.l.b16 %v382
      %v1100 = vunpack.c.l.b16 %v383
      %v1101 = vunpack.c.l.b16 %v384
      %v1102 = vunpack.c.l.b16 %v385
      %v1103 = vunpack.c.l.b16 %v386
      %v1104 = vunpack.c.l.b16 %v387
      %v1105 = vunpack.c.l.b16 %v388
      %v1106 = vunpack.c.l.b16 %v389
      %v1107 = vunpack.c.l.b16 %v390
      %v1108 = vunpack.c.l.b16 %v391
      %v1109 = vunpack.c.l.b16 %v392
      %v1110 = vunpack.c.l.b16 %v393
      %v1111 = vunpack.c.l.b16 %v394
      %v1112 = vunpack.c.l.b16 %v395
      %v1113 = vunpack.c.l.b16 %v396
      %v1114 = vunpack.c.l.b16 %v397
      %v1115 = vunpack.c.l.b16 %v398
      %v1116 = vunpack.c.l.b16 %v399
      %v1117 = vunpack.c.l.b16 %v400
      %v1118 = vunpack.c.l.b16 %v401
      %v1119 = vunpack.c.l.b16 %v402
      %v1120 = vunpack.c.l.b16 %v403
      %v1121 = vunpack.c.l.b16 %v404
      %v1122 = vunpack.c.l.b16 %v405
      %v1123 = vunpack.c.l.b16 %v406
      %v1124 = vunpack.c.l.b16 %v407
      %v1125 = vunpack.c.l.b16 %v408
      %v1126 = vunpack.c.l.b16 %v409
      %v1127 = vunpack.c.l.b16 %v410
      %v1128 = vunpack.c.l.b16 %v411
      %v1129 = vunpack.c.l.b16 %v412
      %v1130 = vunpack.c.l.b16 %v413
      %v1131 = vunpack.c.l.b16 %v414
      %v1132 = vunpack.c.l.b16 %v415
      %v1133 = vunpack.c.l.b16 %v416
      %v1134 = vunpack.c.l.b16 %v417
      %v1135 = vunpack.c.l.b16 %v418
      %v1136 = vunpack.c.l.b16 %v419
      %v1137 = vunpack.c.l.b16 %v420
      %v1138 = vunpack.c.l.b16 %v421
      %v1139 = vunpack.c.l.b16 %v422
      %v1140 = vunpack.c.l.b16 %v423
      %v1141 = vunpack.c.l.b16 %v424
      %v1142 = vunpack.c.l.b16 %v425
      %v1143 = vunpack.c.l.b16 %v426
      %v1144 = vunpack.c.l.b16 %v427
      %v1145 = vunpack.c.l.b16 %v428
      %v1146 = vunpack.c.l.b16 %v429
      %v1147 = vunpack.c.l.b16 %v430
      %v1148 = vunpack.c.l.b16 %v431
      %v1149 = vunpack.c.l.b16 %v432
      %v1150 = vunpack.c.l.b16 %v433
      %v1151 = vunpack.c.l.b16 %v434
      %v1152 = vunpack.c.l.b16 %v435
      %v1153 = vunpack.c.l.b16 %v436
      %v1154 = vunpack.c.l.b16 %v437
      %v1155 = vunpack.c.l.b16 %v438
      %v1156 = vunpack.c.l.b16 %v439
      %v1157 = vunpack.c.l.b16 %v440
      %v1158 = vunpack.c.l.b16 %v441
      %v1159 = vunpack.c.l.b16 %v442
      %v1160 = vunpack.c.l.b16 %v443
      %v1161 = vunpack.c.l.b16 %v444
      %v1162 = vunpack.c.l.b16 %v445
      %v1163 = vunpack.c.l.b16 %v446
      %v1164 = vunpack.c.l.b16 %v447
      %v1165 = vunpack.c.l.b16 %v448
      %v1166 = vpack.c.b16 %v879, %v878
      %v1167 = vpack.c.b16 %v881, %v880
      %v1168 = vpack.c.b16 %v883, %v882
      %v1169 = vpack.c.b16 %v885, %v884
      %v1170 = vpack.c.b16 %v887, %v886
      %v1171 = vpack.c.b16 %v889, %v888
      %v1172 = vpack.c.b16 %v891, %v890
      %v1173 = vpack.c.b16 %v893, %v892
      %v1174 = vpack.c.b16 %v895, %v894
      %v1175 = vpack.c.b16 %v897, %v896
      %v1176 = vpack.c.b16 %v899, %v898
      %v1177 = vpack.c.b16 %v901, %v900
      %v1178 = vpack.c.b16 %v903, %v902
      %v1179 = vpack.c.b16 %v905, %v904
      %v1180 = vpack.c.b16 %v907, %v906
      %v1181 = vpack.c.b16 %v909, %v908
      %v1182 = vpack.c.b16 %v911, %v910
      %v1183 = vpack.c.b16 %v913, %v912
      %v1184 = vpack.c.b16 %v915, %v914
      %v1185 = vpack.c.b16 %v917, %v916
      %v1186 = vpack.c.b16 %v919, %v918
      %v1187 = vpack.c.b16 %v921, %v920
      %v1188 = vpack.c.b16 %v923, %v922
      %v1189 = vpack.c.b16 %v925, %v924
      %v1190 = vpack.c.b16 %v927, %v926
      %v1191 = vpack.c.b16 %v929, %v928
      %v1192 = vpack.c.b16 %v931, %v930
      %v1193 = vpack.c.b16 %v933, %v932
      %v1194 = vpack.c.b16 %v935, %v934
      %v1195 = vpack.c.b16 %v937, %v936
      %v1196 = vpack.c.b16 %v939, %v938
      %v1197 = vpack.c.b16 %v941, %v940
      %v1198 = vpack.c.b16 %v943, %v942
      %v1199 = vpack.c.b16 %v945, %v944
      %v1200 = vpack.c.b16 %v947, %v946
      %v1201 = vpack.c.b16 %v949, %v948
      %v1202 = vpack.c.b16 %v951, %v950
      %v1203 = vpack.c.b16 %v953, %v952
      %v1204 = vpack.c.b16 %v955, %v954
      %v1205 = vpack.c.b16 %v957, %v956
      %v1206 = vpack.c.b16 %v959, %v958
      %v1207 = vpack.c.b16 %v961, %v960
      %v1208 = vpack.c.b16 %v963, %v962
      %v1209 = vpack.c.b16 %v965, %v964
      %v1210 = vpack.c.b16 %v967, %v966
      %v1211 = vpack.c.b16 %v969, %v968
      %v1212 = vpack.c.b16 %v971, %v970
      %v1213 = vpack.c.b16 %v973, %v972
      %v1214 = vpack.c.b16 %v975, %v974
      %v1215 = vpack.c.b16 %v977, %v976
      %v1216 = vpack.c.b16 %v979, %v978
      %v1217 = vpack.c.b16 %v981, %v980
      %v1218 = vpack.c.b16 %v983, %v982
      %v1219 = vpack.c.b16 %v985, %v984
      %v1220 = vpack.c.b16 %v987, %v986
      %v1221 = vpack.c.b16 %v989, %v988
      %v1222 = vpack.c.b16 %v991, %v990
      %v1223 = vpack.c.b16 %v993, %v992
      %v1224 = vpack.c.b16 %v995, %v994
      %v1225 = vpack.c.b16 %v997, %v996
      %v1226 = vpack.c.b16 %v999, %v998
      %v1227 = vpack.c.b16 %v1001, %v1000
      %v1228 = vpack.c.b16 %v1003, %v1002
      %v1229 = vpack.c.b16 %v1005, %v1004
      %v1230 = vpack.c.b16 %v1007, %v1006
      %v1231 = vpack.c.b16 %v1009, %v1008
      %v1232 = vpack.c.b16 %v1011, %v1010
      %v1233 = vpack.c.b16 %v1013, %v1012
      %v1234 = vpack.c.b16 %v1015, %v1014
      %v1235 = vpack.c.b16 %v1017, %v1016
      %v1236 = vpack.c.b16 %v1019, %v1018
      %v1237 = vpack.c.b16 %v1021, %v1020
      %v1238 = vpack.c.b16 %v1023, %v1022
      %v1239 = vpack.c.b16 %v1025, %v1024
      %v1240 = vpack.c.b16 %v1027, %v1026
      %v1241 = vpack.c.b16 %v1029, %v1028
      %v1242 = vpack.c.b16 %v1031, %v1030
      %v1243 = vpack.c.b16 %v1033, %v1032
      %v1244 = vpack.c.b16 %v1035, %v1034
      %v1245 = vpack.c.b16 %v1037, %v1036
      %v1246 = vpack.c.b16 %v1039, %v1038
      %v1247 = vpack.c.b16 %v1041, %v1040
      %v1248 = vpack.c.b16 %v1043, %v1042
      %v1249 = vpack.c.b16 %v1045, %v1044
      %v1250 = vpack.c.b16 %v1047, %v1046
      %v1251 = vpack.c.b16 %v1049, %v1048
      %v1252 = vpack.c.b16 %v1051, %v1050
      %v1253 = vpack.c.b16 %v1053, %v1052
      %v1254 = vpack.c.b16 %v1055, %v1054
      %v1255 = vpack.c.b16 %v1057, %v1056
      %v1256 = vpack.c.b16 %v1059, %v1058
      %v1257 = vpack.c.b16 %v1061, %v1060
      %v1258 = vpack.c.b16 %v1063, %v1062
      %v1259 = vpack.c.b16 %v1065, %v1064
      %v1260 = vpack.c.b16 %v1067, %v1066
      %v1261 = vpack.c.b16 %v1069, %v1068
      %v1262 = vpack.c.b16 %v1071, %v1070
      %v1263 = vpack.c.b16 %v1073, %v1072
      %v1264 = vpack.c.b16 %v1075, %v1074
      %v1265 = vpack.c.b16 %v1077, %v1076
      %v1266 = vpack.c.b16 %v1079, %v1078
      %v1267 = vpack.c.b16 %v1081, %v1080
      %v1268 = vpack.c.b16 %v1083, %v1082
      %v1269 = vpack.c.b16 %v1085, %v1084
      %v1270 = vpack.c.b16 %v1087, %v1086
      %v1271 = vpack.c.b16 %v1089, %v1088
      %v1272 = vpack.c.b16 %v1091, %v1090
      %v1273 = vpack.c.b16 %v1093, %v1092
      %v1274 = vpack.c.b16 %v1095, %v1094
      %v1275 = vpack.c.b16 %v1097, %v1096
      %v1276 = vpack.c.b16 %v1099, %v1098
      %v1277 = vpack.c.b16 %v1101, %v1100
      %v1278 = vpack.c.b16 %v1103, %v1102
      %v1279 = vpack.c.b16 %v1105, %v1104
      %v1280 = vpack.c.b16 %v1107, %v1106
      %v1281 = vpack.c.b16 %v1109, %v1108
      %v1282 = vpack.c.b16 %v1111, %v1110
      %v1283 = vpack.c.b16 %v1113, %v1112
      %v1284 = vpack.c.b16 %v1115, %v1114
      %v1285 = vpack.c.b16 %v1117, %v1116
      %v1286 = vpack.c.b16 %v1119, %v1118
      %v1287 = vpack.c.b16 %v1121, %v1120
      %v1288 = vpack.c.b16 %v1123, %v1122
      %v1289 = vpack.c.b16 %v1125, %v1124
      %v1290 = vpack.c.b16 %v1127, %v1126
      %v1291 = vpack.c.b16 %v1129, %v1128
      %v1292 = vpack.c.b16 %v1131, %v1130
      %v1293 = vpack.c.b16 %v1133, %v1132
      %v1294 = vpack.c.b16 %v1135, %v1134
      %v1295 = vpack.c.b16 %v1137, %v1136
      %v1296 = vpack.c.b16 %v1139, %v1138
      %v1297 = vpack.c.b16 %v1141, %v1140
      %v1298 = vpack.c.b16 %v1143, %v1142
      %v1299 = vpack.c.b16 %v1145, %v1144
      %v1300 = vpack.c.b16 %v1147, %v1146
      %v1301 = vpack.c.b16 %v1149, %v1148
      %v1302 = vpack.c.b16 %v1151, %v1150
      %v1303 = vpack.c.b16 %v1153, %v1152
      %v1304 = vpack.c.b16 %v1155, %v1154
      %v1305 = vpack.c.b16 %v1157, %v1156
      %v1306 = vpack.c.b16 %v1159, %v1158
      %v1307 = vpack.c.b16 %v1161, %v1160
      %v1308 = vpack.c.b16 %v1163, %v1162
      %v1309 = vpack.c.b16 %v1165, %v1164
      %1454 = vmatprep.subr.bf16.mxu0 0
      %1455 = vmatpush1.bf16.msra.mxu0 %v1166
      %1456 = vmatprep.subr.bf16.mxu0 0
      %1457 = vmatpush1.bf16.msra.mxu0 %v1167
      %1458 = vmatprep.subr.bf16.mxu0 0
      %1459 = vmatpush1.bf16.msra.mxu0 %v1168
      %1460 = vmatprep.subr.bf16.mxu0 0
      %1461 = vmatpush1.bf16.msra.mxu0 %v1169
      %1462 = vmatprep.subr.bf16.mxu0 0
      %1463 = vmatpush1.bf16.msra.mxu0 %v1170
      %1464 = vmatprep.subr.bf16.mxu0 0
      %1465 = vmatpush1.bf16.msra.mxu0 %v1171
      %1466 = vmatprep.subr.bf16.mxu0 0
      %1467 = vmatpush1.bf16.msra.mxu0 %v1172
      %1468 = vmatprep.subr.bf16.mxu0 0
      %1469 = vmatpush1.bf16.msra.mxu0 %v1173
      %1470 = vmatprep.subr.bf16.mxu0 0
      %1471 = vmatpush1.bf16.msra.mxu0 %v1174
      %1472 = vmatprep.subr.bf16.mxu0 0
      %1473 = vmatpush1.bf16.msra.mxu0 %v1175
      %1474 = vmatprep.subr.bf16.mxu0 0
      %1475 = vmatpush1.bf16.msra.mxu0 %v1176
      %1476 = vmatprep.subr.bf16.mxu0 0
      %1477 = vmatpush1.bf16.msra.mxu0 %v1177
      %1478 = vmatprep.subr.bf16.mxu0 0
      %1479 = vmatpush1.bf16.msra.mxu0 %v1178
      %1480 = vmatprep.subr.bf16.mxu0 0
      %1481 = vmatpush1.bf16.msra.mxu0 %v1179
      %1482 = vmatprep.subr.bf16.mxu0 0
      %1483 = vmatpush1.bf16.msra.mxu0 %v1180
      %1484 = vmatprep.subr.bf16.mxu0 0
      %1485 = vmatpush1.bf16.msra.mxu0 %v1181
      %1486 = vmatprep.mubr.bf16.mxu0 %v489
      %1487 = vmatmul.mubr.bf16.gmra.mrb[0].mxu0 %v475
      %v1488 = vpop.f32.mrb[0].mxu0
      %v1489 = vadd.f32 0.0, %v1488
      %v1490 = vpop.f32.mrb[0].mxu0
      %v1491 = vpop.f32.mrb[0].mxu0
      %v1492 = vpop.f32.mrb[0].mxu0
      %1493 = vdwg.mxu0
      %1494 = vmatprep.subr.bf16.mxu0 0
      %1495 = vmatpush1.bf16.msra.mxu0 %v1182
      %1496 = vmatprep.subr.bf16.mxu0 0
      %1497 = vmatpush1.bf16.msra.mxu0 %v1183
      %1498 = vmatprep.subr.bf16.mxu0 0
      %1499 = vmatpush1.bf16.msra.mxu0 %v1184
      %1500 = vmatprep.subr.bf16.mxu0 0
      %1501 = vmatpush1.bf16.msra.mxu0 %v1185
      %1502 = vmatprep.subr.bf16.mxu0 0
      %1503 = vmatpush1.bf16.msra.mxu0 %v1186
      %1504 = vmatprep.subr.bf16.mxu0 0
      %1505 = vmatpush1.bf16.msra.mxu0 %v1187
      %1506 = vmatprep.subr.bf16.mxu0 0
      %1507 = vmatpush1.bf16.msra.mxu0 %v1188
      %1508 = vmatprep.subr.bf16.mxu0 0
      %1509 = vmatpush1.bf16.msra.mxu0 %v1189
      %1510 = vmatprep.subr.bf16.mxu0 0
      %1511 = vmatpush1.bf16.msra.mxu0 %v1190
      %1512 = vmatprep.subr.bf16.mxu0 0
      %1513 = vmatpush1.bf16.msra.mxu0 %v1191
      %1514 = vmatprep.subr.bf16.mxu0 0
      %1515 = vmatpush1.bf16.msra.mxu0 %v1192
      %1516 = vmatprep.subr.bf16.mxu0 0
      %1517 = vmatpush1.bf16.msra.mxu0 %v1193
      %1518 = vmatprep.subr.bf16.mxu0 0
      %1519 = vmatpush1.bf16.msra.mxu0 %v1194
      %1520 = vmatprep.subr.bf16.mxu0 0
      %1521 = vmatpush1.bf16.msra.mxu0 %v1195
      %1522 = vmatprep.subr.bf16.mxu0 0
      %1523 = vmatpush1.bf16.msra.mxu0 %v1196
      %1524 = vmatprep.subr.bf16.mxu0 0
      %1525 = vmatpush1.bf16.msra.mxu0 %v1197
      %1526 = vmatprep.mubr.bf16.mxu0 %v499
      %1527 = vmatmul.mubr.bf16.gmra.mrb[0].mxu0 %v497
      %v1528 = vpop.f32.mrb[0].mxu0
      %v1529 = vadd.f32 %v1489, %v1528
      %v1530 = vpop.f32.mrb[0].mxu0
      %v1531 = vpop.f32.mrb[0].mxu0
      %v1532 = vpop.f32.mrb[0].mxu0
      %1533 = vdwg.mxu0
      %1534 = vmatprep.subr.bf16.mxu0 0
      %1535 = vmatpush1.bf16.msra.mxu0 %v1198
      %1536 = vmatprep.subr.bf16.mxu0 0
      %1537 = vmatpush1.bf16.msra.mxu0 %v1199
      %1538 = vmatprep.subr.bf16.mxu0 0
      %1539 = vmatpush1.bf16.msra.mxu0 %v1200
      %1540 = vmatprep.subr.bf16.mxu0 0
      %1541 = vmatpush1.bf16.msra.mxu0 %v1201
      %1542 = vmatprep.subr.bf16.mxu0 0
      %1543 = vmatpush1.bf16.msra.mxu0 %v1202
      %1544 = vmatprep.subr.bf16.mxu0 0
      %1545 = vmatpush1.bf16.msra.mxu0 %v1203
      %1546 = vmatprep.subr.bf16.mxu0 0
      %1547 = vmatpush1.bf16.msra.mxu0 %v1204
      %1548 = vmatprep.subr.bf16.mxu0 0
      %1549 = vmatpush1.bf16.msra.mxu0 %v1205
      %1550 = vmatprep.subr.bf16.mxu0 0
      %1551 = vmatpush1.bf16.msra.mxu0 %v1206
      %1552 = vmatprep.subr.bf16.mxu0 0
      %1553 = vmatpush1.bf16.msra.mxu0 %v1207
      %1554 = vmatprep.subr.bf16.mxu0 0
      %1555 = vmatpush1.bf16.msra.mxu0 %v1208
      %1556 = vmatprep.subr.bf16.mxu0 0
      %1557 = vmatpush1.bf16.msra.mxu0 %v1209
      %1558 = vmatprep.subr.bf16.mxu0 0
      %1559 = vmatpush1.bf16.msra.mxu0 %v1210
      %1560 = vmatprep.subr.bf16.mxu0 0
      %1561 = vmatpush1.bf16.msra.mxu0 %v1211
      %1562 = vmatprep.subr.bf16.mxu0 0
      %1563 = vmatpush1.bf16.msra.mxu0 %v1212
      %1564 = vmatprep.subr.bf16.mxu0 0
      %1565 = vmatpush1.bf16.msra.mxu0 %v1213
      %1566 = vmatprep.mubr.bf16.mxu0 %v496
      %1567 = vmatmul.mubr.bf16.gmra.mrb[0].mxu0 %v482
      %v1568 = vpop.f32.mrb[0].mxu0
      %v1569 = vadd.f32 %v1529, %v1568
      %v1570 = vpop.f32.mrb[0].mxu0
      %v1571 = vpop.f32.mrb[0].mxu0
      %v1572 = vpop.f32.mrb[0].mxu0
      %1573 = vdwg.mxu0
      %1574 = vmatprep.subr.bf16.mxu0 0
      %1575 = vmatpush1.bf16.msra.mxu0 %v1214
      %1576 = vmatprep.subr.bf16.mxu0 0
      %1577 = vmatpush1.bf16.msra.mxu0 %v1215
      %1578 = vmatprep.subr.bf16.mxu0 0
      %1579 = vmatpush1.bf16.msra.mxu0 %v1216
      %1580 = vmatprep.subr.bf16.mxu0 0
      %1581 = vmatpush1.bf16.msra.mxu0 %v1217
      %1582 = vmatprep.subr.bf16.mxu0 0
      %1583 = vmatpush1.bf16.msra.mxu0 %v1218
      %1584 = vmatprep.subr.bf16.mxu0 0
      %1585 = vmatpush1.bf16.msra.mxu0 %v1219
      %1586 = vmatprep.subr.bf16.mxu0 0
      %1587 = vmatpush1.bf16.msra.mxu0 %v1220
      %1588 = vmatprep.subr.bf16.mxu0 0
      %1589 = vmatpush1.bf16.msra.mxu0 %v1221
      %1590 = vmatprep.subr.bf16.mxu0 0
      %1591 = vmatpush1.bf16.msra.mxu0 %v1222
      %1592 = vmatprep.subr.bf16.mxu0 0
      %1593 = vmatpush1.bf16.msra.mxu0 %v1223
      %1594 = vmatprep.subr.bf16.mxu0 0
      %1595 = vmatpush1.bf16.msra.mxu0 %v1224
      %1596 = vmatprep.subr.bf16.mxu0 0
      %1597 = vmatpush1.bf16.msra.mxu0 %v1225
      %1598 = vmatprep.subr.bf16.mxu0 0
      %1599 = vmatpush1.bf16.msra.mxu0 %v1226
      %1600 = vmatprep.subr.bf16.mxu0 0
      %1601 = vmatpush1.bf16.msra.mxu0 %v1227
      %1602 = vmatprep.subr.bf16.mxu0 0
      %1603 = vmatpush1.bf16.msra.mxu0 %v1228
      %1604 = vmatprep.subr.bf16.mxu0 0
      %1605 = vmatpush1.bf16.msra.mxu0 %v1229
      %1606 = vmatprep.mubr.bf16.mxu0 %v500
      %1607 = vmatmul.mubr.bf16.gmra.mrb[0].mxu0 %v498
      %v1608 = vpop.f32.mrb[0].mxu0
      %v1609 = vadd.f32 %v1569, %v1608
      %v1610 = vpop.f32.mrb[0].mxu0
      %v1611 = vpop.f32.mrb[0].mxu0
      %v1612 = vpop.f32.mrb[0].mxu0
      %1613 = vdwg.mxu0
      %1614 = vmatprep.subr.bf16.mxu0 0
      %1615 = vmatpush1.bf16.msra.mxu0 %v1230
      %1616 = vmatprep.subr.bf16.mxu0 0
      %1617 = vmatpush1.bf16.msra.mxu0 %v1231
      %1618 = vmatprep.subr.bf16.mxu0 0
      %1619 = vmatpush1.bf16.msra.mxu0 %v1232
      %1620 = vmatprep.subr.bf16.mxu0 0
      %1621 = vmatpush1.bf16.msra.mxu0 %v1233
      %1622 = vmatprep.subr.bf16.mxu0 0
      %1623 = vmatpush1.bf16.msra.mxu0 %v1234
      %1624 = vmatprep.subr.bf16.mxu0 0
      %1625 = vmatpush1.bf16.msra.mxu0 %v1235
      %1626 = vmatprep.subr.bf16.mxu0 0
      %1627 = vmatpush1.bf16.msra.mxu0 %v1236
      %1628 = vmatprep.subr.bf16.mxu0 0
      %1629 = vmatpush1.bf16.msra.mxu0 %v1237
      %1630 = vmatprep.subr.bf16.mxu0 0
      %1631 = vmatpush1.bf16.msra.mxu0 %v1238
      %1632 = vmatprep.subr.bf16.mxu0 0
      %1633 = vmatpush1.bf16.msra.mxu0 %v1239
      %1634 = vmatprep.subr.bf16.mxu0 0
      %1635 = vmatpush1.bf16.msra.mxu0 %v1240
      %1636 = vmatprep.subr.bf16.mxu0 0
      %1637 = vmatpush1.bf16.msra.mxu0 %v1241
      %1638 = vmatprep.subr.bf16.mxu0 0
      %1639 = vmatpush1.bf16.msra.mxu0 %v1242
      %1640 = vmatprep.subr.bf16.mxu0 0
      %1641 = vmatpush1.bf16.msra.mxu0 %v1243
      %1642 = vmatprep.subr.bf16.mxu0 0
      %1643 = vmatpush1.bf16.msra.mxu0 %v1244
      %1644 = vmatprep.subr.bf16.mxu0 0
      %1645 = vmatpush1.bf16.msra.mxu0 %v1245
      %1646 = vmatprep.mubr.bf16.mxu0 %v538
      %1647 = vmatmul.mubr.bf16.gmra.mrb[0].mxu0 %v524
      %v1648 = vpop.f32.mrb[0].mxu0
      %v1649 = vadd.f32 %v1609, %v1648
      %v1650 = vpop.f32.mrb[0].mxu0
      %v1651 = vpop.f32.mrb[0].mxu0
      %v1652 = vpop.f32.mrb[0].mxu0
      %1653 = vdwg.mxu0
      %1654 = vmatprep.subr.bf16.mxu0 0
      %1655 = vmatpush1.bf16.msra.mxu0 %v1246
      %1656 = vmatprep.subr.bf16.mxu0 0
      %1657 = vmatpush1.bf16.msra.mxu0 %v1247
      %1658 = vmatprep.subr.bf16.mxu0 0
      %1659 = vmatpush1.bf16.msra.mxu0 %v1248
      %1660 = vmatprep.subr.bf16.mxu0 0
      %1661 = vmatpush1.bf16.msra.mxu0 %v1249
      %1662 = vmatprep.subr.bf16.mxu0 0
      %1663 = vmatpush1.bf16.msra.mxu0 %v1250
      %1664 = vmatprep.subr.bf16.mxu0 0
      %1665 = vmatpush1.bf16.msra.mxu0 %v1251
      %1666 = vmatprep.subr.bf16.mxu0 0
      %1667 = vmatpush1.bf16.msra.mxu0 %v1252
      %1668 = vmatprep.subr.bf16.mxu0 0
      %1669 = vmatpush1.bf16.msra.mxu0 %v1253
      %1670 = vmatprep.subr.bf16.mxu0 0
      %1671 = vmatpush1.bf16.msra.mxu0 %v1254
      %1672 = vmatprep.subr.bf16.mxu0 0
      %1673 = vmatpush1.bf16.msra.mxu0 %v1255
      %1674 = vmatprep.subr.bf16.mxu0 0
      %1675 = vmatpush1.bf16.msra.mxu0 %v1256
      %1676 = vmatprep.subr.bf16.mxu0 0
      %1677 = vmatpush1.bf16.msra.mxu0 %v1257
      %1678 = vmatprep.subr.bf16.mxu0 0
      %1679 = vmatpush1.bf16.msra.mxu0 %v1258
      %1680 = vmatprep.subr.bf16.mxu0 0
      %1681 = vmatpush1.bf16.msra.mxu0 %v1259
      %1682 = vmatprep.subr.bf16.mxu0 0
      %1683 = vmatpush1.bf16.msra.mxu0 %v1260
      %1684 = vmatprep.subr.bf16.mxu0 0
      %1685 = vmatpush1.bf16.msra.mxu0 %v1261
      %1686 = vmatprep.mubr.bf16.mxu0 %v548
      %1687 = vmatmul.mubr.bf16.gmra.mrb[0].mxu0 %v546
      %v1688 = vpop.f32.mrb[0].mxu0
      %v1689 = vadd.f32 %v1649, %v1688
      %v1690 = vpop.f32.mrb[0].mxu0
      %v1691 = vpop.f32.mrb[0].mxu0
      %v1692 = vpop.f32.mrb[0].mxu0
      %1693 = vdwg.mxu0
      %1694 = vmatprep.subr.bf16.mxu0 0
      %1695 = vmatpush1.bf16.msra.mxu0 %v1262
      %1696 = vmatprep.subr.bf16.mxu0 0
      %1697 = vmatpush1.bf16.msra.mxu0 %v1263
      %1698 = vmatprep.subr.bf16.mxu0 0
      %1699 = vmatpush1.bf16.msra.mxu0 %v1264
      %1700 = vmatprep.subr.bf16.mxu0 0
      %1701 = vmatpush1.bf16.msra.mxu0 %v1265
      %1702 = vmatprep.subr.bf16.mxu0 0
      %1703 = vmatpush1.bf16.msra.mxu0 %v1266
      %1704 = vmatprep.subr.bf16.mxu0 0
      %1705 = vmatpush1.bf16.msra.mxu0 %v1267
      %1706 = vmatprep.subr.bf16.mxu0 0
      %1707 = vmatpush1.bf16.msra.mxu0 %v1268
      %1708 = vmatprep.subr.bf16.mxu0 0
      %1709 = vmatpush1.bf16.msra.mxu0 %v1269
      %1710 = vmatprep.subr.bf16.mxu0 0
      %1711 = vmatpush1.bf16.msra.mxu0 %v1270
      %1712 = vmatprep.subr.bf16.mxu0 0
      %1713 = vmatpush1.bf16.msra.mxu0 %v1271
      %1714 = vmatprep.subr.bf16.mxu0 0
      %1715 = vmatpush1.bf16.msra.mxu0 %v1272
      %1716 = vmatprep.subr.bf16.mxu0 0
      %1717 = vmatpush1.bf16.msra.mxu0 %v1273
      %1718 = vmatprep.subr.bf16.mxu0 0
      %1719 = vmatpush1.bf16.msra.mxu0 %v1274
      %1720 = vmatprep.subr.bf16.mxu0 0
      %1721 = vmatpush1.bf16.msra.mxu0 %v1275
      %1722 = vmatprep.subr.bf16.mxu0 0
      %1723 = vmatpush1.bf16.msra.mxu0 %v1276
      %1724 = vmatprep.subr.bf16.mxu0 0
      %1725 = vmatpush1.bf16.msra.mxu0 %v1277
      %1726 = vmatprep.mubr.bf16.mxu0 %v545
      %1727 = vmatmul.mubr.bf16.gmra.mrb[0].mxu0 %v531
      %v1728 = vpop.f32.mrb[0].mxu0
      %v1729 = vadd.f32 %v1689, %v1728
      %v1730 = vpop.f32.mrb[0].mxu0
      %v1731 = vpop.f32.mrb[0].mxu0
      %v1732 = vpop.f32.mrb[0].mxu0
      %1733 = vdwg.mxu0
      %1734 = vmatprep.subr.bf16.mxu0 0
      %1735 = vmatpush1.bf16.msra.mxu0 %v1278
      %1736 = vmatprep.subr.bf16.mxu0 0
      %1737 = vmatpush1.bf16.msra.mxu0 %v1279
      %1738 = vmatprep.subr.bf16.mxu0 0
      %1739 = vmatpush1.bf16.msra.mxu0 %v1280
      %1740 = vmatprep.subr.bf16.mxu0 0
      %1741 = vmatpush1.bf16.msra.mxu0 %v1281
      %1742 = vmatprep.subr.bf16.mxu0 0
      %1743 = vmatpush1.bf16.msra.mxu0 %v1282
      %1744 = vmatprep.subr.bf16.mxu0 0
      %1745 = vmatpush1.bf16.msra.mxu0 %v1283
      %1746 = vmatprep.subr.bf16.mxu0 0
      %1747 = vmatpush1.bf16.msra.mxu0 %v1284
      %1748 = vmatprep.subr.bf16.mxu0 0
      %1749 = vmatpush1.bf16.msra.mxu0 %v1285
      %1750 = vmatprep.subr.bf16.mxu0 0
      %1751 = vmatpush1.bf16.msra.mxu0 %v1286
      %1752 = vmatprep.subr.bf16.mxu0 0
      %1753 = vmatpush1.bf16.msra.mxu0 %v1287
      %1754 = vmatprep.subr.bf16.mxu0 0
      %1755 = vmatpush1.bf16.msra.mxu0 %v1288
      %1756 = vmatprep.subr.bf16.mxu0 0
      %1757 = vmatpush1.bf16.msra.mxu0 %v1289
      %1758 = vmatprep.subr.bf16.mxu0 0
      %1759 = vmatpush1.bf16.msra.mxu0 %v1290
      %1760 = vmatprep.subr.bf16.mxu0 0
      %1761 = vmatpush1.bf16.msra.mxu0 %v1291
      %1762 = vmatprep.subr.bf16.mxu0 0
      %1763 = vmatpush1.bf16.msra.mxu0 %v1292
      %1764 = vmatprep.subr.bf16.mxu0 0
      %1765 = vmatpush1.bf16.msra.mxu0 %v1293
      %1766 = vmatprep.mubr.bf16.mxu0 %v549
      %1767 = vmatmul.mubr.bf16.gmra.mrb[0].mxu0 %v547
      %v1768 = vpop.f32.mrb[0].mxu0
      %v1769 = vadd.f32 %v1729, %v1768
      %v1770 = vpop.f32.mrb[0].mxu0
      %v1771 = vpop.f32.mrb[0].mxu0
      %v1772 = vpop.f32.mrb[0].mxu0
      %1773 = vdwg.mxu0
      %1774 = vmatprep.subr.bf16.mxu0 0
      %1775 = vmatpush1.bf16.msra.mxu0 %v1294
      %1776 = vmatprep.subr.bf16.mxu0 0
      %1777 = vmatpush1.bf16.msra.mxu0 %v1295
      %1778 = vmatprep.subr.bf16.mxu0 0
      %1779 = vmatpush1.bf16.msra.mxu0 %v1296
      %1780 = vmatprep.subr.bf16.mxu0 0
      %1781 = vmatpush1.bf16.msra.mxu0 %v1297
      %1782 = vmatprep.subr.bf16.mxu0 0
      %1783 = vmatpush1.bf16.msra.mxu0 %v1298
      %1784 = vmatprep.subr.bf16.mxu0 0
      %1785 = vmatpush1.bf16.msra.mxu0 %v1299
      %1786 = vmatprep.subr.bf16.mxu0 0
      %1787 = vmatpush1.bf16.msra.mxu0 %v1300
      %1788 = vmatprep.subr.bf16.mxu0 0
      %1789 = vmatpush1.bf16.msra.mxu0 %v1301
      %1790 = vmatprep.subr.bf16.mxu0 0
      %1791 = vmatpush1.bf16.msra.mxu0 %v1302
      %1792 = vmatprep.subr.bf16.mxu0 0
      %1793 = vmatpush1.bf16.msra.mxu0 %v1303
      %1794 = vmatprep.subr.bf16.mxu0 0
      %1795 = vmatpush1.bf16.msra.mxu0 %v1304
      %1796 = vmatprep.subr.bf16.mxu0 0
      %1797 = vmatpush1.bf16.msra.mxu0 %v1305
      %1798 = vmatprep.subr.bf16.mxu0 0
      %1799 = vmatpush1.bf16.msra.mxu0 %v1306
      %1800 = vmatprep.subr.bf16.mxu0 0
      %1801 = vmatpush1.bf16.msra.mxu0 %v1307
      %1802 = vmatprep.subr.bf16.mxu0 0
      %1803 = vmatpush1.bf16.msra.mxu0 %v1308
      %1804 = vmatprep.subr.bf16.mxu0 0
      %1805 = vmatpush1.bf16.msra.mxu0 %v1309
      %1806 = vmatprep.mubr.bf16.mxu0 %v571
      %1807 = vmatmul.mubr.bf16.gmra.mrb[0].mxu0 %v564
      %v1808 = vpop.f32.mrb[0].mxu0
      %v1809 = vadd.f32 %v1769, %v1808
      %v1810 = vpop.f32.mrb[0].mxu0
      %v1811 = vpop.f32.mrb[0].mxu0
      %v1812 = vpop.f32.mrb[0].mxu0
      %1813 = vdwg.mxu0
      %v1814 = vmul.f32 %v1809, 0.001
      %1815 = vst [vmem:[%s156] sm:$0x1] %v1814
      %p1816 = scmp.lt.s32.totalorder %s13, 1
      %s1817 = scalar_select %p1816, %s13, 1
      %s1818 = scalar_lea.vmem %s2, %s1817
      // Predicated region
      $region29: #{siamese_forward.5} parent=27 // pred_check
        %p1819 = pneg %p83
      $region30: #{siamese_forward.5} parent=27 // pred_check_branch
        %1821 = sbr.rel (%p1819) target = $region32
      $region31: #{siamese_forward.5} parent=27 // pred_region
        _
      $region32: #{siamese_forward.5} parent=27 // pred_fallthru
        _
    $region28: #{siamese_forward.5} parent=5 // pred_fallthru
      _
    %p1822 = scmp.le.s32.totalorder 2, %s8
    // Predicated region
    $region33: #{siamese_forward.5} parent=5 // pred_check
      %p1823 = pneg %p1822
    $region34: #{siamese_forward.5} parent=5 // pred_check_branch
      %1825 = sbr.rel (%p1823) target = $region36
    $region35: #{siamese_forward.5} parent=5 // pred_region
      %s1826 = ssub.s32 %s8, 2
      // Predicated region
      $region37: #{siamese_forward.5} parent=35 // pred_check
        %p1827 = pneg %p89
      $region38: #{siamese_forward.5} parent=35 // pred_check_branch
        %1829 = sbr.rel (%p1827) target = $region40
      $region39: #{siamese_forward.5} parent=35 // pred_region
        %p1830 = scmp.lt.s32.totalorder %s14, 1
        %s1831 = scalar_select %p1830, %s14, 1
        %s1832 = scalar_lea.vmem %s2, %s1831
      $region40: #{siamese_forward.5} parent=35 // pred_fallthru
        _
    $region36: #{siamese_forward.5} parent=5 // pred_fallthru
      _
  $region6: #{siamese_forward.5} parent=0 // loop_footer
    %s12 = sadd.s32 1, %s8
  $region7: #{siamese_forward.5} parent=0 // loop_footer_branch
    %7 = sbr.rel target = $region3
  $region8: #{siamese_forward.5} parent=0 // loop_exit
    _

</llo_original>
